<compile_context>
chip_gen: v7x
topology: tpu7x:2x2x1
jax: 0.10.0
libtpu: 0.0.40
codegen_flags: <defaults>
</compile_context>

<pallas_src>
import functools

import jax
import jax.numpy as jnp
from jax import lax
from jax.experimental import pallas as pl
from jax.experimental.pallas import tpu as pltpu


def _round_up(x, m):
    return ((x + m - 1) // m) * m


# ---------------------------------------------------------------------------
# Pallas kernel: one chunk of T_CHUNK GRU time steps per grid iteration.
# Hidden state is carried across grid iterations in a VMEM scratch.
# ---------------------------------------------------------------------------
def _gru_chunk_kernel(gi_ref, w_hh_ref, b_hn_ref, out_ref, h_scratch,
                      *, hp, t_chunk):
    c = pl.program_id(0)

    # h0 = ones (matches the PyTorch module's Variable(torch.ones(...))).
    @pl.when(c == 0)
    def _():
        h_scratch[...] = jnp.ones(h_scratch.shape, h_scratch.dtype)

    bp = h_scratch.shape[0]
    w_hh = w_hh_ref[...]                                    # (Hp, 3Hp), loaded once
    b_hn = jnp.broadcast_to(b_hn_ref[...], (bp, hp))        # broadcast hoisted

    def step(t, h):
        gi = gi_ref[t]                                      # (Bp, 3Hp) precomputed
        gh = jnp.dot(h, w_hh, preferred_element_type=jnp.float32)  # (Bp, 3Hp)
        # 128-aligned gate slices (Hp is a multiple of 128).
        i_r = gi[:, 0 * hp:1 * hp]
        i_z = gi[:, 1 * hp:2 * hp]
        i_n = gi[:, 2 * hp:3 * hp]
        h_r = gh[:, 0 * hp:1 * hp]
        h_z = gh[:, 1 * hp:2 * hp]
        h_n = gh[:, 2 * hp:3 * hp]
        r = jax.nn.sigmoid(i_r + h_r)          # b_ir + b_hr already folded into i_r
        z = jax.nn.sigmoid(i_z + h_z)          # b_iz + b_hz already folded into i_z
        n = jnp.tanh(i_n + r * (h_n + b_hn))   # b_in folded into i_n; b_hn stays here
        h_new = (1.0 - z) * n + z * h
        out_ref[t] = h_new                     # lane-dense (Bp, Hp) store
        return h_new

    h_final = lax.fori_loop(0, t_chunk, step, h_scratch[...], unroll=True)
    h_scratch[...] = h_final


def gru_all_ht_pallas(gi_pad, w_hh_pad, b_hn_pad, t_chunk):
    """gi_pad: (Sp, Bp, 3Hp) precomputed input gates -> all h_t (Sp, Bp, Hp)."""
    s_pad, bp, three_hp = gi_pad.shape
    hp = three_hp // 3
    num_chunks = s_pad // t_chunk

    kernel = functools.partial(_gru_chunk_kernel, hp=hp, t_chunk=t_chunk)

    return pl.pallas_call(
        kernel,
        out_shape=jax.ShapeDtypeStruct((s_pad, bp, hp), jnp.float32),
        grid_spec=pltpu.PrefetchScalarGridSpec(
            num_scalar_prefetch=0,
            grid=(num_chunks,),
            in_specs=[
                pl.BlockSpec((t_chunk, bp, three_hp), lambda c: (c, 0, 0)),  # gi chunk
                pl.BlockSpec((hp, three_hp), lambda c: (0, 0)),              # W_hh^T
                pl.BlockSpec((1, hp), lambda c: (0, 0)),                     # b_hn
            ],
            out_specs=pl.BlockSpec((t_chunk, bp, hp), lambda c: (c, 0, 0)),
            scratch_shapes=[pltpu.VMEM((bp, hp), jnp.float32)],
        ),
        compiler_params=pltpu.CompilerParams(
            dimension_semantics=("arbitrary",)),   # sequential recurrence over chunks
    )(gi_pad, w_hh_pad, b_hn_pad)


# ---------------------------------------------------------------------------
# Module-level wrapper (embedding gather + hoisted input projection are glue).
# ---------------------------------------------------------------------------
def init_params(key, vocab_size, embedding_dim, hidden_size):
    k_emb, k_wih, k_whh, k_bih, k_bhh = jax.random.split(key, 5)
    bound = 1.0 / jnp.sqrt(hidden_size)
    return {
        # nn.Embedding default init: N(0, 1)
        "embedding": jax.random.normal(k_emb, (vocab_size, embedding_dim),
                                       jnp.float32),
        # nn.GRU default init: U(-1/sqrt(H), 1/sqrt(H)); stored transposed.
        "w_ih_t": jax.random.uniform(k_wih, (embedding_dim, 3 * hidden_size),
                                     jnp.float32, -bound, bound),
        "w_hh_t": jax.random.uniform(k_whh, (hidden_size, 3 * hidden_size),
                                     jnp.float32, -bound, bound),
        "b_ih": jax.random.uniform(k_bih, (1, 3 * hidden_size),
                                   jnp.float32, -bound, bound),
        "b_hh": jax.random.uniform(k_bhh, (1, 3 * hidden_size),
                                   jnp.float32, -bound, bound),
    }


def retrieve_last_index(text):
    """Index of the last non-zero token in each row of (B, S) int ids."""
    S = text.shape[1]
    mask = (text != 0)
    return (S - 1 - jnp.argmax(mask[:, ::-1], axis=1)).astype(jnp.int32)


def _pad_gates_last(x, h, hp):
    """Pad each of the 3 gate blocks of the last axis from width h to hp."""
    pads = [(0, 0)] * (x.ndim - 1) + [(0, hp - h)]
    parts = [jnp.pad(x[..., g * h:(g + 1) * h], pads) for g in range(3)]
    return jnp.concatenate(parts, axis=-1)


def text_embed_encoder_forward(params, text, need_all_ht, t_chunk=None):
    """text: (B, S) int32 token ids. Returns (B, S, H) or (B, H)."""
    B, S = text.shape
    H = params["w_hh_t"].shape[0]

    ids_last_word = retrieve_last_index(text)

    # Gather embeddings directly in sequence-major (S, B, E): no float transpose.
    embedded_sb = jnp.take(params["embedding"], text.T, axis=0)        # (S, B, E)

    # Hoisted input projection for ALL timesteps as one big matmul; fold b_ih
    # plus the r/z thirds of b_hh into it (only b_hn must stay in the kernel).
    fused_bias = jnp.concatenate(
        [params["b_ih"][:, :2 * H] + params["b_hh"][:, :2 * H],
         params["b_ih"][:, 2 * H:]], axis=-1)                          # (1, 3H)
    gi = jnp.einsum("sbe,eg->sbg", embedded_sb, params["w_ih_t"]) + fused_bias

    # Pad to TPU-friendly tiles: B -> mult of 8 (sublanes), H -> mult of 128
    # (lanes) so gate slices are 128-aligned and all stores are lane-dense.
    Bp = _round_up(B, 8)
    Hp = _round_up(H, 128)
    if t_chunk is None:
        t_chunk = S if S <= 16 else 16
    Sp = _round_up(S, t_chunk)

    gi_pad = _pad_gates_last(gi, H, Hp)                                # (S, B, 3Hp)
    gi_pad = jnp.pad(gi_pad, ((0, Sp - S), (0, Bp - B), (0, 0)))       # (Sp, Bp, 3Hp)
    w_hh_pad = _pad_gates_last(params["w_hh_t"], H, Hp)                # (H, 3Hp)
    w_hh_pad = jnp.pad(w_hh_pad, ((0, Hp - H), (0, 0)))                # (Hp, 3Hp)
    b_hn_pad = jnp.pad(params["b_hh"][:, 2 * H:], ((0, 0), (0, Hp - H)))  # (1, Hp)

    all_ht_sb = gru_all_ht_pallas(gi_pad, w_hh_pad, b_hn_pad, t_chunk)
    all_ht_sb = all_ht_sb[:S, :B, :H]                                  # (S, B, H)

    if need_all_ht:
        # batch_first output required by the module contract (single transpose).
        return jnp.transpose(all_ht_sb, (1, 0, 2))                     # (B, S, H)
    # get_last_ht_batch: gather the last non-padding h_t directly from (S,B,H).
    return all_ht_sb[ids_last_word, jnp.arange(B)]                     # (B, H)


# ---------------------------------------------------------------------------
# Pure-JAX reference GRU (correctness check).
# ---------------------------------------------------------------------------
def gru_all_ht_ref(embedded_sb, w_ih_t, w_hh_t, b_ih, b_hh):
    B = embedded_sb.shape[1]
    H = w_hh_t.shape[0]
    h0 = jnp.ones((B, H), jnp.float32)

    def step(h, x):
        gi = x @ w_ih_t + b_ih
        gh = h @ w_hh_t + b_hh
        i_r, i_z, i_n = gi[:, :H], gi[:, H:2 * H], gi[:, 2 * H:]
        h_r, h_z, h_n = gh[:, :H], gh[:, H:2 * H], gh[:, 2 * H:]
        r = jax.nn.sigmoid(i_r + h_r)
        z = jax.nn.sigmoid(i_z + h_z)
        n = jnp.tanh(i_n + r * h_n)
        h_new = (1.0 - z) * n + z * h
        return h_new, h_new

    _, all_ht = lax.scan(step, h0, embedded_sb)
    return all_ht


if __name__ == "__main__":
    batch = 2
    seq = 8
    vocab_size = 50
    embedding_dim = 32
    rnn_hidden_size = 32
    # n_rnn_layers = 1 (the PyTorch module's h0 shape only supports 1 layer).

    key = jax.random.PRNGKey(0)
    k_params, k_text = jax.random.split(key)
    params = init_params(k_params, vocab_size, embedding_dim, rnn_hidden_size)

    # Token ids in [1, vocab) with trailing zero padding; every row has at
    # least one non-zero token (required by retrieve_last_index).
    text = jax.random.randint(k_text, (batch, seq), 1, vocab_size,
                              dtype=jnp.int32)
    pad_mask = jnp.arange(seq)[None, :] < jnp.array([[6], [4]])  # valid lens 6, 4
    text = jnp.where(pad_mask, text, 0)

    # Run kernel in both return_all_ht modes.
    all_ht = text_embed_encoder_forward(params, text, need_all_ht=True)
    last_ht = text_embed_encoder_forward(params, text, need_all_ht=False)
    jax.block_until_ready(all_ht)
    jax.block_until_ready(last_ht)

    # Correctness check against a pure-JAX GRU reference.
    embedded_sb = jnp.take(params["embedding"], text.T, axis=0)        # (S, B, E)
    ref_all_ht = jnp.transpose(
        gru_all_ht_ref(embedded_sb, params["w_ih_t"], params["w_hh_t"],
                       params["b_ih"], params["b_hh"]), (1, 0, 2))
    assert all_ht.shape == (batch, seq, rnn_hidden_size)
    assert last_ht.shape == (batch, rnn_hidden_size)
    assert jnp.allclose(all_ht, ref_all_ht, atol=2e-5, rtol=2e-5)
    ids = retrieve_last_index(text)
    assert jnp.allclose(last_ht, ref_all_ht[jnp.arange(batch), ids],
                        atol=2e-5, rtol=2e-5)

    print("KERNEL_OK")
</pallas_src>

<mosaic_0001>
module attributes {stable_mosaic.version = 11 : i64} {
  func.func @_gru_chunk_kernel(%arg0: i32, %arg1: memref<8x8x384xf32, #tpu.memory_space<vmem>>, %arg2: memref<128x384xf32, #tpu.memory_space<vmem>>, %arg3: memref<1x128xf32, #tpu.memory_space<vmem>>, %arg4: memref<8x8x128xf32, #tpu.memory_space<vmem>>, %arg5: memref<8x128xf32, #tpu.memory_space<vmem>>) attributes {dimension_semantics = [#tpu.dimension_semantics<arbitrary>], iteration_bounds = array<i64: 1>, scalar_prefetch = 0 : i64, scratch_operands = 1 : i64, tpu.core_type = #tpu.core_type<tc>, window_params = [{transform_indices = @transform_0, window_bounds = array<i64: 8, 8, 384>}, {pipeline_mode = #tpu.pipeline_mode<synchronous>, transform_indices = @transform_1, window_bounds = array<i64: 128, 384>}, {pipeline_mode = #tpu.pipeline_mode<synchronous>, transform_indices = @transform_2, window_bounds = array<i64: 1, 128>}, {transform_indices = @transform_3, window_bounds = array<i64: 8, 8, 128>}]} {
    %c0_i32 = arith.constant 0 : i32
    %0 = arith.cmpi eq, %arg0, %c0_i32 : i32
    %1 = arith.extui %0 : i1 to i32
    %c0_i32_0 = arith.constant 0 : i32
    %2 = arith.cmpi ne, %1, %c0_i32_0 : i32
    scf.if %2 {
      %cst_72 = arith.constant 1.000000e+00 : f32
      %289 = vector.broadcast %cst_72 : f32 to vector<8x128xf32>
      %c0_73 = arith.constant 0 : index
      %c0_74 = arith.constant 0 : index
      %290 = vector.load %arg5[%c0_73, %c0_74] : memref<8x128xf32, #tpu.memory_space<vmem>>, vector<8x128xf32>
      tpu.vector_store %arg5[%c0_73, %c0_74], %289 {strides = array<i32>} : memref<8x128xf32, #tpu.memory_space<vmem>>, vector<8x128xf32>,
    } else {
    }
    %c0 = arith.constant 0 : index
    %c0_1 = arith.constant 0 : index
    %3 = vector.load %arg2[%c0, %c0_1] : memref<128x384xf32, #tpu.memory_space<vmem>>, vector<128x384xf32>
    %c0_2 = arith.constant 0 : index
    %c0_3 = arith.constant 0 : index
    %4 = vector.load %arg3[%c0_2, %c0_3] : memref<1x128xf32, #tpu.memory_space<vmem>>, vector<1x128xf32>
    %5 = vector.shape_cast %4 : vector<1x128xf32> to vector<1x128xf32>
    %6 = vector.broadcast %5 : vector<1x128xf32> to vector<8x128xf32>
    %c0_4 = arith.constant 0 : index
    %c0_5 = arith.constant 0 : index
    %7 = vector.load %arg5[%c0_4, %c0_5] : memref<8x128xf32, #tpu.memory_space<vmem>>, vector<8x128xf32>
    %c0_i32_6 = arith.constant 0 : i32
    %8 = arith.index_cast %c0_i32_6 : i32 to index
    %c0_7 = arith.constant 0 : index
    %c0_8 = arith.constant 0 : index
    %9 = vector.load %arg1[%8, %c0_7, %c0_8] : memref<8x8x384xf32, #tpu.memory_space<vmem>>, vector<1x8x384xf32>
    %10 = vector.shape_cast %9 : vector<1x8x384xf32> to vector<8x384xf32>
    %cst = arith.constant dense<0.000000e+00> : vector<8x384xf32>
    %11 = tpu.matmul %7, %3, %cst {dimension_numbers = #tpu.dot_dimension_numbers<[1], [0], [0], [1], [0, 0, 1, 1], [], []>} : vector<8x128xf32>, vector<128x384xf32>, vector<8x384xf32> -> vector<8x384xf32>
    %12 = vector.extract_strided_slice %10 {offsets = [0, 0], sizes = [8, 128], strides = [1, 1]} : vector<8x384xf32> to vector<8x128xf32>
    %13 = vector.extract_strided_slice %10 {offsets = [0, 128], sizes = [8, 128], strides = [1, 1]} : vector<8x384xf32> to vector<8x128xf32>
    %14 = vector.extract_strided_slice %10 {offsets = [0, 256], sizes = [8, 128], strides = [1, 1]} : vector<8x384xf32> to vector<8x128xf32>
    %15 = vector.extract_strided_slice %11 {offsets = [0, 0], sizes = [8, 128], strides = [1, 1]} : vector<8x384xf32> to vector<8x128xf32>
    %16 = vector.extract_strided_slice %11 {offsets = [0, 128], sizes = [8, 128], strides = [1, 1]} : vector<8x384xf32> to vector<8x128xf32>
    %17 = vector.extract_strided_slice %11 {offsets = [0, 256], sizes = [8, 128], strides = [1, 1]} : vector<8x384xf32> to vector<8x128xf32>
    %18 = arith.addf %12, %15 : vector<8x128xf32>
    %19 = arith.negf %18 : vector<8x128xf32>
    %20 = math.exp %19 : vector<8x128xf32>
    %cst_9 = arith.constant 1.000000e+00 : f32
    %21 = vector.broadcast %cst_9 : f32 to vector<8x128xf32>
    %22 = arith.addf %21, %20 : vector<8x128xf32>
    %23 = arith.divf %21, %22 : vector<8x128xf32>
    %24 = arith.addf %13, %16 : vector<8x128xf32>
    %25 = arith.negf %24 : vector<8x128xf32>
    %26 = math.exp %25 : vector<8x128xf32>
    %cst_10 = arith.constant 1.000000e+00 : f32
    %27 = vector.broadcast %cst_10 : f32 to vector<8x128xf32>
    %28 = arith.addf %27, %26 : vector<8x128xf32>
    %29 = arith.divf %27, %28 : vector<8x128xf32>
    %30 = arith.addf %17, %6 : vector<8x128xf32>
    %31 = arith.mulf %23, %30 : vector<8x128xf32>
    %32 = arith.addf %14, %31 : vector<8x128xf32>
    %33 = math.tanh %32 : vector<8x128xf32>
    %cst_11 = arith.constant 1.000000e+00 : f32
    %34 = vector.broadcast %cst_11 : f32 to vector<8x128xf32>
    %35 = arith.subf %34, %29 : vector<8x128xf32>
    %36 = arith.mulf %35, %33 : vector<8x128xf32>
    %37 = arith.mulf %29, %7 : vector<8x128xf32>
    %38 = arith.addf %36, %37 : vector<8x128xf32>
    %39 = arith.index_cast %c0_i32_6 : i32 to index
    %c0_12 = arith.constant 0 : index
    %c0_13 = arith.constant 0 : index
    %40 = vector.load %arg4[%39, %c0_12, %c0_13] : memref<8x8x128xf32, #tpu.memory_space<vmem>>, vector<1x8x128xf32>
    %41 = vector.shape_cast %40 : vector<1x8x128xf32> to vector<8x128xf32>
    %42 = vector.shape_cast %38 : vector<8x128xf32> to vector<1x8x128xf32>
    tpu.vector_store %arg4[%39, %c0_12, %c0_13], %42 {strides = array<i32>} : memref<8x8x128xf32, #tpu.memory_space<vmem>>, vector<1x8x128xf32>,
    %c1_i32 = arith.constant 1 : i32
    %43 = arith.index_cast %c1_i32 : i32 to index
    %c0_14 = arith.constant 0 : index
    %c0_15 = arith.constant 0 : index
    %44 = vector.load %arg1[%43, %c0_14, %c0_15] : memref<8x8x384xf32, #tpu.memory_space<vmem>>, vector<1x8x384xf32>
    %45 = vector.shape_cast %44 : vector<1x8x384xf32> to vector<8x384xf32>
    %cst_16 = arith.constant dense<0.000000e+00> : vector<8x384xf32>
    %46 = tpu.matmul %38, %3, %cst_16 {dimension_numbers = #tpu.dot_dimension_numbers<[1], [0], [0], [1], [0, 0, 1, 1], [], []>} : vector<8x128xf32>, vector<128x384xf32>, vector<8x384xf32> -> vector<8x384xf32>
    %47 = vector.extract_strided_slice %45 {offsets = [0, 0], sizes = [8, 128], strides = [1, 1]} : vector<8x384xf32> to vector<8x128xf32>
    %48 = vector.extract_strided_slice %45 {offsets = [0, 128], sizes = [8, 128], strides = [1, 1]} : vector<8x384xf32> to vector<8x128xf32>
    %49 = vector.extract_strided_slice %45 {offsets = [0, 256], sizes = [8, 128], strides = [1, 1]} : vector<8x384xf32> to vector<8x128xf32>
    %50 = vector.extract_strided_slice %46 {offsets = [0, 0], sizes = [8, 128], strides = [1, 1]} : vector<8x384xf32> to vector<8x128xf32>
    %51 = vector.extract_strided_slice %46 {offsets = [0, 128], sizes = [8, 128], strides = [1, 1]} : vector<8x384xf32> to vector<8x128xf32>
    %52 = vector.extract_strided_slice %46 {offsets = [0, 256], sizes = [8, 128], strides = [1, 1]} : vector<8x384xf32> to vector<8x128xf32>
    %53 = arith.addf %47, %50 : vector<8x128xf32>
    %54 = arith.negf %53 : vector<8x128xf32>
    %55 = math.exp %54 : vector<8x128xf32>
    %cst_17 = arith.constant 1.000000e+00 : f32
    %56 = vector.broadcast %cst_17 : f32 to vector<8x128xf32>
    %57 = arith.addf %56, %55 : vector<8x128xf32>
    %58 = arith.divf %56, %57 : vector<8x128xf32>
    %59 = arith.addf %48, %51 : vector<8x128xf32>
    %60 = arith.negf %59 : vector<8x128xf32>
    %61 = math.exp %60 : vector<8x128xf32>
    %cst_18 = arith.constant 1.000000e+00 : f32
    %62 = vector.broadcast %cst_18 : f32 to vector<8x128xf32>
    %63 = arith.addf %62, %61 : vector<8x128xf32>
    %64 = arith.divf %62, %63 : vector<8x128xf32>
    %65 = arith.addf %52, %6 : vector<8x128xf32>
    %66 = arith.mulf %58, %65 : vector<8x128xf32>
    %67 = arith.addf %49, %66 : vector<8x128xf32>
    %68 = math.tanh %67 : vector<8x128xf32>
    %cst_19 = arith.constant 1.000000e+00 : f32
    %69 = vector.broadcast %cst_19 : f32 to vector<8x128xf32>
    %70 = arith.subf %69, %64 : vector<8x128xf32>
    %71 = arith.mulf %70, %68 : vector<8x128xf32>
    %72 = arith.mulf %64, %38 : vector<8x128xf32>
    %73 = arith.addf %71, %72 : vector<8x128xf32>
    %74 = arith.index_cast %c1_i32 : i32 to index
    %c0_20 = arith.constant 0 : index
    %c0_21 = arith.constant 0 : index
    %75 = vector.load %arg4[%74, %c0_20, %c0_21] : memref<8x8x128xf32, #tpu.memory_space<vmem>>, vector<1x8x128xf32>
    %76 = vector.shape_cast %75 : vector<1x8x128xf32> to vector<8x128xf32>
    %77 = vector.shape_cast %73 : vector<8x128xf32> to vector<1x8x128xf32>
    tpu.vector_store %arg4[%74, %c0_20, %c0_21], %77 {strides = array<i32>} : memref<8x8x128xf32, #tpu.memory_space<vmem>>, vector<1x8x128xf32>,
    %c2_i32 = arith.constant 2 : i32
    %78 = arith.index_cast %c2_i32 : i32 to index
    %c0_22 = arith.constant 0 : index
    %c0_23 = arith.constant 0 : index
    %79 = vector.load %arg1[%78, %c0_22, %c0_23] : memref<8x8x384xf32, #tpu.memory_space<vmem>>, vector<1x8x384xf32>
    %80 = vector.shape_cast %79 : vector<1x8x384xf32> to vector<8x384xf32>
    %cst_24 = arith.constant dense<0.000000e+00> : vector<8x384xf32>
    %81 = tpu.matmul %73, %3, %cst_24 {dimension_numbers = #tpu.dot_dimension_numbers<[1], [0], [0], [1], [0, 0, 1, 1], [], []>} : vector<8x128xf32>, vector<128x384xf32>, vector<8x384xf32> -> vector<8x384xf32>
    %82 = vector.extract_strided_slice %80 {offsets = [0, 0], sizes = [8, 128], strides = [1, 1]} : vector<8x384xf32> to vector<8x128xf32>
    %83 = vector.extract_strided_slice %80 {offsets = [0, 128], sizes = [8, 128], strides = [1, 1]} : vector<8x384xf32> to vector<8x128xf32>
    %84 = vector.extract_strided_slice %80 {offsets = [0, 256], sizes = [8, 128], strides = [1, 1]} : vector<8x384xf32> to vector<8x128xf32>
    %85 = vector.extract_strided_slice %81 {offsets = [0, 0], sizes = [8, 128], strides = [1, 1]} : vector<8x384xf32> to vector<8x128xf32>
    %86 = vector.extract_strided_slice %81 {offsets = [0, 128], sizes = [8, 128], strides = [1, 1]} : vector<8x384xf32> to vector<8x128xf32>
    %87 = vector.extract_strided_slice %81 {offsets = [0, 256], sizes = [8, 128], strides = [1, 1]} : vector<8x384xf32> to vector<8x128xf32>
    %88 = arith.addf %82, %85 : vector<8x128xf32>
    %89 = arith.negf %88 : vector<8x128xf32>
    %90 = math.exp %89 : vector<8x128xf32>
    %cst_25 = arith.constant 1.000000e+00 : f32
    %91 = vector.broadcast %cst_25 : f32 to vector<8x128xf32>
    %92 = arith.addf %91, %90 : vector<8x128xf32>
    %93 = arith.divf %91, %92 : vector<8x128xf32>
    %94 = arith.addf %83, %86 : vector<8x128xf32>
    %95 = arith.negf %94 : vector<8x128xf32>
    %96 = math.exp %95 : vector<8x128xf32>
    %cst_26 = arith.constant 1.000000e+00 : f32
    %97 = vector.broadcast %cst_26 : f32 to vector<8x128xf32>
    %98 = arith.addf %97, %96 : vector<8x128xf32>
    %99 = arith.divf %97, %98 : vector<8x128xf32>
    %100 = arith.addf %87, %6 : vector<8x128xf32>
    %101 = arith.mulf %93, %100 : vector<8x128xf32>
    %102 = arith.addf %84, %101 : vector<8x128xf32>
    %103 = math.tanh %102 : vector<8x128xf32>
    %cst_27 = arith.constant 1.000000e+00 : f32
    %104 = vector.broadcast %cst_27 : f32 to vector<8x128xf32>
    %105 = arith.subf %104, %99 : vector<8x128xf32>
    %106 = arith.mulf %105, %103 : vector<8x128xf32>
    %107 = arith.mulf %99, %73 : vector<8x128xf32>
    %108 = arith.addf %106, %107 : vector<8x128xf32>
    %109 = arith.index_cast %c2_i32 : i32 to index
    %c0_28 = arith.constant 0 : index
    %c0_29 = arith.constant 0 : index
    %110 = vector.load %arg4[%109, %c0_28, %c0_29] : memref<8x8x128xf32, #tpu.memory_space<vmem>>, vector<1x8x128xf32>
    %111 = vector.shape_cast %110 : vector<1x8x128xf32> to vector<8x128xf32>
    %112 = vector.shape_cast %108 : vector<8x128xf32> to vector<1x8x128xf32>
    tpu.vector_store %arg4[%109, %c0_28, %c0_29], %112 {strides = array<i32>} : memref<8x8x128xf32, #tpu.memory_space<vmem>>, vector<1x8x128xf32>,
    %c3_i32 = arith.constant 3 : i32
    %113 = arith.index_cast %c3_i32 : i32 to index
    %c0_30 = arith.constant 0 : index
    %c0_31 = arith.constant 0 : index
    %114 = vector.load %arg1[%113, %c0_30, %c0_31] : memref<8x8x384xf32, #tpu.memory_space<vmem>>, vector<1x8x384xf32>
    %115 = vector.shape_cast %114 : vector<1x8x384xf32> to vector<8x384xf32>
    %cst_32 = arith.constant dense<0.000000e+00> : vector<8x384xf32>
    %116 = tpu.matmul %108, %3, %cst_32 {dimension_numbers = #tpu.dot_dimension_numbers<[1], [0], [0], [1], [0, 0, 1, 1], [], []>} : vector<8x128xf32>, vector<128x384xf32>, vector<8x384xf32> -> vector<8x384xf32>
    %117 = vector.extract_strided_slice %115 {offsets = [0, 0], sizes = [8, 128], strides = [1, 1]} : vector<8x384xf32> to vector<8x128xf32>
    %118 = vector.extract_strided_slice %115 {offsets = [0, 128], sizes = [8, 128], strides = [1, 1]} : vector<8x384xf32> to vector<8x128xf32>
    %119 = vector.extract_strided_slice %115 {offsets = [0, 256], sizes = [8, 128], strides = [1, 1]} : vector<8x384xf32> to vector<8x128xf32>
    %120 = vector.extract_strided_slice %116 {offsets = [0, 0], sizes = [8, 128], strides = [1, 1]} : vector<8x384xf32> to vector<8x128xf32>
    %121 = vector.extract_strided_slice %116 {offsets = [0, 128], sizes = [8, 128], strides = [1, 1]} : vector<8x384xf32> to vector<8x128xf32>
    %122 = vector.extract_strided_slice %116 {offsets = [0, 256], sizes = [8, 128], strides = [1, 1]} : vector<8x384xf32> to vector<8x128xf32>
    %123 = arith.addf %117, %120 : vector<8x128xf32>
    %124 = arith.negf %123 : vector<8x128xf32>
    %125 = math.exp %124 : vector<8x128xf32>
    %cst_33 = arith.constant 1.000000e+00 : f32
    %126 = vector.broadcast %cst_33 : f32 to vector<8x128xf32>
    %127 = arith.addf %126, %125 : vector<8x128xf32>
    %128 = arith.divf %126, %127 : vector<8x128xf32>
    %129 = arith.addf %118, %121 : vector<8x128xf32>
    %130 = arith.negf %129 : vector<8x128xf32>
    %131 = math.exp %130 : vector<8x128xf32>
    %cst_34 = arith.constant 1.000000e+00 : f32
    %132 = vector.broadcast %cst_34 : f32 to vector<8x128xf32>
    %133 = arith.addf %132, %131 : vector<8x128xf32>
    %134 = arith.divf %132, %133 : vector<8x128xf32>
    %135 = arith.addf %122, %6 : vector<8x128xf32>
    %136 = arith.mulf %128, %135 : vector<8x128xf32>
    %137 = arith.addf %119, %136 : vector<8x128xf32>
    %138 = math.tanh %137 : vector<8x128xf32>
    %cst_35 = arith.constant 1.000000e+00 : f32
    %139 = vector.broadcast %cst_35 : f32 to vector<8x128xf32>
    %140 = arith.subf %139, %134 : vector<8x128xf32>
    %141 = arith.mulf %140, %138 : vector<8x128xf32>
    %142 = arith.mulf %134, %108 : vector<8x128xf32>
    %143 = arith.addf %141, %142 : vector<8x128xf32>
    %144 = arith.index_cast %c3_i32 : i32 to index
    %c0_36 = arith.constant 0 : index
    %c0_37 = arith.constant 0 : index
    %145 = vector.load %arg4[%144, %c0_36, %c0_37] : memref<8x8x128xf32, #tpu.memory_space<vmem>>, vector<1x8x128xf32>
    %146 = vector.shape_cast %145 : vector<1x8x128xf32> to vector<8x128xf32>
    %147 = vector.shape_cast %143 : vector<8x128xf32> to vector<1x8x128xf32>
    tpu.vector_store %arg4[%144, %c0_36, %c0_37], %147 {strides = array<i32>} : memref<8x8x128xf32, #tpu.memory_space<vmem>>, vector<1x8x128xf32>,
    %c4_i32 = arith.constant 4 : i32
    %148 = arith.index_cast %c4_i32 : i32 to index
    %c0_38 = arith.constant 0 : index
    %c0_39 = arith.constant 0 : index
    %149 = vector.load %arg1[%148, %c0_38, %c0_39] : memref<8x8x384xf32, #tpu.memory_space<vmem>>, vector<1x8x384xf32>
    %150 = vector.shape_cast %149 : vector<1x8x384xf32> to vector<8x384xf32>
    %cst_40 = arith.constant dense<0.000000e+00> : vector<8x384xf32>
    %151 = tpu.matmul %143, %3, %cst_40 {dimension_numbers = #tpu.dot_dimension_numbers<[1], [0], [0], [1], [0, 0, 1, 1], [], []>} : vector<8x128xf32>, vector<128x384xf32>, vector<8x384xf32> -> vector<8x384xf32>
    %152 = vector.extract_strided_slice %150 {offsets = [0, 0], sizes = [8, 128], strides = [1, 1]} : vector<8x384xf32> to vector<8x128xf32>
    %153 = vector.extract_strided_slice %150 {offsets = [0, 128], sizes = [8, 128], strides = [1, 1]} : vector<8x384xf32> to vector<8x128xf32>
    %154 = vector.extract_strided_slice %150 {offsets = [0, 256], sizes = [8, 128], strides = [1, 1]} : vector<8x384xf32> to vector<8x128xf32>
    %155 = vector.extract_strided_slice %151 {offsets = [0, 0], sizes = [8, 128], strides = [1, 1]} : vector<8x384xf32> to vector<8x128xf32>
    %156 = vector.extract_strided_slice %151 {offsets = [0, 128], sizes = [8, 128], strides = [1, 1]} : vector<8x384xf32> to vector<8x128xf32>
    %157 = vector.extract_strided_slice %151 {offsets = [0, 256], sizes = [8, 128], strides = [1, 1]} : vector<8x384xf32> to vector<8x128xf32>
    %158 = arith.addf %152, %155 : vector<8x128xf32>
    %159 = arith.negf %158 : vector<8x128xf32>
    %160 = math.exp %159 : vector<8x128xf32>
    %cst_41 = arith.constant 1.000000e+00 : f32
    %161 = vector.broadcast %cst_41 : f32 to vector<8x128xf32>
    %162 = arith.addf %161, %160 : vector<8x128xf32>
    %163 = arith.divf %161, %162 : vector<8x128xf32>
    %164 = arith.addf %153, %156 : vector<8x128xf32>
    %165 = arith.negf %164 : vector<8x128xf32>
    %166 = math.exp %165 : vector<8x128xf32>
    %cst_42 = arith.constant 1.000000e+00 : f32
    %167 = vector.broadcast %cst_42 : f32 to vector<8x128xf32>
    %168 = arith.addf %167, %166 : vector<8x128xf32>
    %169 = arith.divf %167, %168 : vector<8x128xf32>
    %170 = arith.addf %157, %6 : vector<8x128xf32>
    %171 = arith.mulf %163, %170 : vector<8x128xf32>
    %172 = arith.addf %154, %171 : vector<8x128xf32>
    %173 = math.tanh %172 : vector<8x128xf32>
    %cst_43 = arith.constant 1.000000e+00 : f32
    %174 = vector.broadcast %cst_43 : f32 to vector<8x128xf32>
    %175 = arith.subf %174, %169 : vector<8x128xf32>
    %176 = arith.mulf %175, %173 : vector<8x128xf32>
    %177 = arith.mulf %169, %143 : vector<8x128xf32>
    %178 = arith.addf %176, %177 : vector<8x128xf32>
    %179 = arith.index_cast %c4_i32 : i32 to index
    %c0_44 = arith.constant 0 : index
    %c0_45 = arith.constant 0 : index
    %180 = vector.load %arg4[%179, %c0_44, %c0_45] : memref<8x8x128xf32, #tpu.memory_space<vmem>>, vector<1x8x128xf32>
    %181 = vector.shape_cast %180 : vector<1x8x128xf32> to vector<8x128xf32>
    %182 = vector.shape_cast %178 : vector<8x128xf32> to vector<1x8x128xf32>
    tpu.vector_store %arg4[%179, %c0_44, %c0_45], %182 {strides = array<i32>} : memref<8x8x128xf32, #tpu.memory_space<vmem>>, vector<1x8x128xf32>,
    %c5_i32 = arith.constant 5 : i32
    %183 = arith.index_cast %c5_i32 : i32 to index
    %c0_46 = arith.constant 0 : index
    %c0_47 = arith.constant 0 : index
    %184 = vector.load %arg1[%183, %c0_46, %c0_47] : memref<8x8x384xf32, #tpu.memory_space<vmem>>, vector<1x8x384xf32>
    %185 = vector.shape_cast %184 : vector<1x8x384xf32> to vector<8x384xf32>
    %cst_48 = arith.constant dense<0.000000e+00> : vector<8x384xf32>
    %186 = tpu.matmul %178, %3, %cst_48 {dimension_numbers = #tpu.dot_dimension_numbers<[1], [0], [0], [1], [0, 0, 1, 1], [], []>} : vector<8x128xf32>, vector<128x384xf32>, vector<8x384xf32> -> vector<8x384xf32>
    %187 = vector.extract_strided_slice %185 {offsets = [0, 0], sizes = [8, 128], strides = [1, 1]} : vector<8x384xf32> to vector<8x128xf32>
    %188 = vector.extract_strided_slice %185 {offsets = [0, 128], sizes = [8, 128], strides = [1, 1]} : vector<8x384xf32> to vector<8x128xf32>
    %189 = vector.extract_strided_slice %185 {offsets = [0, 256], sizes = [8, 128], strides = [1, 1]} : vector<8x384xf32> to vector<8x128xf32>
    %190 = vector.extract_strided_slice %186 {offsets = [0, 0], sizes = [8, 128], strides = [1, 1]} : vector<8x384xf32> to vector<8x128xf32>
    %191 = vector.extract_strided_slice %186 {offsets = [0, 128], sizes = [8, 128], strides = [1, 1]} : vector<8x384xf32> to vector<8x128xf32>
    %192 = vector.extract_strided_slice %186 {offsets = [0, 256], sizes = [8, 128], strides = [1, 1]} : vector<8x384xf32> to vector<8x128xf32>
    %193 = arith.addf %187, %190 : vector<8x128xf32>
    %194 = arith.negf %193 : vector<8x128xf32>
    %195 = math.exp %194 : vector<8x128xf32>
    %cst_49 = arith.constant 1.000000e+00 : f32
    %196 = vector.broadcast %cst_49 : f32 to vector<8x128xf32>
    %197 = arith.addf %196, %195 : vector<8x128xf32>
    %198 = arith.divf %196, %197 : vector<8x128xf32>
    %199 = arith.addf %188, %191 : vector<8x128xf32>
    %200 = arith.negf %199 : vector<8x128xf32>
    %201 = math.exp %200 : vector<8x128xf32>
    %cst_50 = arith.constant 1.000000e+00 : f32
    %202 = vector.broadcast %cst_50 : f32 to vector<8x128xf32>
    %203 = arith.addf %202, %201 : vector<8x128xf32>
    %204 = arith.divf %202, %203 : vector<8x128xf32>
    %205 = arith.addf %192, %6 : vector<8x128xf32>
    %206 = arith.mulf %198, %205 : vector<8x128xf32>
    %207 = arith.addf %189, %206 : vector<8x128xf32>
    %208 = math.tanh %207 : vector<8x128xf32>
    %cst_51 = arith.constant 1.000000e+00 : f32
    %209 = vector.broadcast %cst_51 : f32 to vector<8x128xf32>
    %210 = arith.subf %209, %204 : vector<8x128xf32>
    %211 = arith.mulf %210, %208 : vector<8x128xf32>
    %212 = arith.mulf %204, %178 : vector<8x128xf32>
    %213 = arith.addf %211, %212 : vector<8x128xf32>
    %214 = arith.index_cast %c5_i32 : i32 to index
    %c0_52 = arith.constant 0 : index
    %c0_53 = arith.constant 0 : index
    %215 = vector.load %arg4[%214, %c0_52, %c0_53] : memref<8x8x128xf32, #tpu.memory_space<vmem>>, vector<1x8x128xf32>
    %216 = vector.shape_cast %215 : vector<1x8x128xf32> to vector<8x128xf32>
    %217 = vector.shape_cast %213 : vector<8x128xf32> to vector<1x8x128xf32>
    tpu.vector_store %arg4[%214, %c0_52, %c0_53], %217 {strides = array<i32>} : memref<8x8x128xf32, #tpu.memory_space<vmem>>, vector<1x8x128xf32>,
    %c6_i32 = arith.constant 6 : i32
    %218 = arith.index_cast %c6_i32 : i32 to index
    %c0_54 = arith.constant 0 : index
    %c0_55 = arith.constant 0 : index
    %219 = vector.load %arg1[%218, %c0_54, %c0_55] : memref<8x8x384xf32, #tpu.memory_space<vmem>>, vector<1x8x384xf32>
    %220 = vector.shape_cast %219 : vector<1x8x384xf32> to vector<8x384xf32>
    %cst_56 = arith.constant dense<0.000000e+00> : vector<8x384xf32>
    %221 = tpu.matmul %213, %3, %cst_56 {dimension_numbers = #tpu.dot_dimension_numbers<[1], [0], [0], [1], [0, 0, 1, 1], [], []>} : vector<8x128xf32>, vector<128x384xf32>, vector<8x384xf32> -> vector<8x384xf32>
    %222 = vector.extract_strided_slice %220 {offsets = [0, 0], sizes = [8, 128], strides = [1, 1]} : vector<8x384xf32> to vector<8x128xf32>
    %223 = vector.extract_strided_slice %220 {offsets = [0, 128], sizes = [8, 128], strides = [1, 1]} : vector<8x384xf32> to vector<8x128xf32>
    %224 = vector.extract_strided_slice %220 {offsets = [0, 256], sizes = [8, 128], strides = [1, 1]} : vector<8x384xf32> to vector<8x128xf32>
    %225 = vector.extract_strided_slice %221 {offsets = [0, 0], sizes = [8, 128], strides = [1, 1]} : vector<8x384xf32> to vector<8x128xf32>
    %226 = vector.extract_strided_slice %221 {offsets = [0, 128], sizes = [8, 128], strides = [1, 1]} : vector<8x384xf32> to vector<8x128xf32>
    %227 = vector.extract_strided_slice %221 {offsets = [0, 256], sizes = [8, 128], strides = [1, 1]} : vector<8x384xf32> to vector<8x128xf32>
    %228 = arith.addf %222, %225 : vector<8x128xf32>
    %229 = arith.negf %228 : vector<8x128xf32>
    %230 = math.exp %229 : vector<8x128xf32>
    %cst_57 = arith.constant 1.000000e+00 : f32
    %231 = vector.broadcast %cst_57 : f32 to vector<8x128xf32>
    %232 = arith.addf %231, %230 : vector<8x128xf32>
    %233 = arith.divf %231, %232 : vector<8x128xf32>
    %234 = arith.addf %223, %226 : vector<8x128xf32>
    %235 = arith.negf %234 : vector<8x128xf32>
    %236 = math.exp %235 : vector<8x128xf32>
    %cst_58 = arith.constant 1.000000e+00 : f32
    %237 = vector.broadcast %cst_58 : f32 to vector<8x128xf32>
    %238 = arith.addf %237, %236 : vector<8x128xf32>
    %239 = arith.divf %237, %238 : vector<8x128xf32>
    %240 = arith.addf %227, %6 : vector<8x128xf32>
    %241 = arith.mulf %233, %240 : vector<8x128xf32>
    %242 = arith.addf %224, %241 : vector<8x128xf32>
    %243 = math.tanh %242 : vector<8x128xf32>
    %cst_59 = arith.constant 1.000000e+00 : f32
    %244 = vector.broadcast %cst_59 : f32 to vector<8x128xf32>
    %245 = arith.subf %244, %239 : vector<8x128xf32>
    %246 = arith.mulf %245, %243 : vector<8x128xf32>
    %247 = arith.mulf %239, %213 : vector<8x128xf32>
    %248 = arith.addf %246, %247 : vector<8x128xf32>
    %249 = arith.index_cast %c6_i32 : i32 to index
    %c0_60 = arith.constant 0 : index
    %c0_61 = arith.constant 0 : index
    %250 = vector.load %arg4[%249, %c0_60, %c0_61] : memref<8x8x128xf32, #tpu.memory_space<vmem>>, vector<1x8x128xf32>
    %251 = vector.shape_cast %250 : vector<1x8x128xf32> to vector<8x128xf32>
    %252 = vector.shape_cast %248 : vector<8x128xf32> to vector<1x8x128xf32>
    tpu.vector_store %arg4[%249, %c0_60, %c0_61], %252 {strides = array<i32>} : memref<8x8x128xf32, #tpu.memory_space<vmem>>, vector<1x8x128xf32>,
    %c7_i32 = arith.constant 7 : i32
    %253 = arith.index_cast %c7_i32 : i32 to index
    %c0_62 = arith.constant 0 : index
    %c0_63 = arith.constant 0 : index
    %254 = vector.load %arg1[%253, %c0_62, %c0_63] : memref<8x8x384xf32, #tpu.memory_space<vmem>>, vector<1x8x384xf32>
    %255 = vector.shape_cast %254 : vector<1x8x384xf32> to vector<8x384xf32>
    %cst_64 = arith.constant dense<0.000000e+00> : vector<8x384xf32>
    %256 = tpu.matmul %248, %3, %cst_64 {dimension_numbers = #tpu.dot_dimension_numbers<[1], [0], [0], [1], [0, 0, 1, 1], [], []>} : vector<8x128xf32>, vector<128x384xf32>, vector<8x384xf32> -> vector<8x384xf32>
    %257 = vector.extract_strided_slice %255 {offsets = [0, 0], sizes = [8, 128], strides = [1, 1]} : vector<8x384xf32> to vector<8x128xf32>
    %258 = vector.extract_strided_slice %255 {offsets = [0, 128], sizes = [8, 128], strides = [1, 1]} : vector<8x384xf32> to vector<8x128xf32>
    %259 = vector.extract_strided_slice %255 {offsets = [0, 256], sizes = [8, 128], strides = [1, 1]} : vector<8x384xf32> to vector<8x128xf32>
    %260 = vector.extract_strided_slice %256 {offsets = [0, 0], sizes = [8, 128], strides = [1, 1]} : vector<8x384xf32> to vector<8x128xf32>
    %261 = vector.extract_strided_slice %256 {offsets = [0, 128], sizes = [8, 128], strides = [1, 1]} : vector<8x384xf32> to vector<8x128xf32>
    %262 = vector.extract_strided_slice %256 {offsets = [0, 256], sizes = [8, 128], strides = [1, 1]} : vector<8x384xf32> to vector<8x128xf32>
    %263 = arith.addf %257, %260 : vector<8x128xf32>
    %264 = arith.negf %263 : vector<8x128xf32>
    %265 = math.exp %264 : vector<8x128xf32>
    %cst_65 = arith.constant 1.000000e+00 : f32
    %266 = vector.broadcast %cst_65 : f32 to vector<8x128xf32>
    %267 = arith.addf %266, %265 : vector<8x128xf32>
    %268 = arith.divf %266, %267 : vector<8x128xf32>
    %269 = arith.addf %258, %261 : vector<8x128xf32>
    %270 = arith.negf %269 : vector<8x128xf32>
    %271 = math.exp %270 : vector<8x128xf32>
    %cst_66 = arith.constant 1.000000e+00 : f32
    %272 = vector.broadcast %cst_66 : f32 to vector<8x128xf32>
    %273 = arith.addf %272, %271 : vector<8x128xf32>
    %274 = arith.divf %272, %273 : vector<8x128xf32>
    %275 = arith.addf %262, %6 : vector<8x128xf32>
    %276 = arith.mulf %268, %275 : vector<8x128xf32>
    %277 = arith.addf %259, %276 : vector<8x128xf32>
    %278 = math.tanh %277 : vector<8x128xf32>
    %cst_67 = arith.constant 1.000000e+00 : f32
    %279 = vector.broadcast %cst_67 : f32 to vector<8x128xf32>
    %280 = arith.subf %279, %274 : vector<8x128xf32>
    %281 = arith.mulf %280, %278 : vector<8x128xf32>
    %282 = arith.mulf %274, %248 : vector<8x128xf32>
    %283 = arith.addf %281, %282 : vector<8x128xf32>
    %284 = arith.index_cast %c7_i32 : i32 to index
    %c0_68 = arith.constant 0 : index
    %c0_69 = arith.constant 0 : index
    %285 = vector.load %arg4[%284, %c0_68, %c0_69] : memref<8x8x128xf32, #tpu.memory_space<vmem>>, vector<1x8x128xf32>
    %286 = vector.shape_cast %285 : vector<1x8x128xf32> to vector<8x128xf32>
    %287 = vector.shape_cast %283 : vector<8x128xf32> to vector<1x8x128xf32>
    tpu.vector_store %arg4[%284, %c0_68, %c0_69], %287 {strides = array<i32>} : memref<8x8x128xf32, #tpu.memory_space<vmem>>, vector<1x8x128xf32>,
    %c8_i32 = arith.constant 8 : i32
    %c0_70 = arith.constant 0 : index
    %c0_71 = arith.constant 0 : index
    %288 = vector.load %arg5[%c0_70, %c0_71] : memref<8x128xf32, #tpu.memory_space<vmem>>, vector<8x128xf32>
    tpu.vector_store %arg5[%c0_70, %c0_71], %283 {strides = array<i32>} : memref<8x128xf32, #tpu.memory_space<vmem>>, vector<8x128xf32>,
    return
  }
  func.func @transform_0(%arg0: i32) -> (i32, i32, i32) {
    %c0_i32 = arith.constant 0 : i32
    %c0_i32_0 = arith.constant 0 : i32
    %c0_i32_1 = arith.constant 0 : i32
    return %arg0, %c0_i32, %c0_i32_0 : i32, i32, i32
  }
  func.func @transform_1(%arg0: i32) -> (i32, i32) {
    %c0_i32 = arith.constant 0 : i32
    %c0_i32_0 = arith.constant 0 : i32
    %c0_i32_1 = arith.constant 0 : i32
    return %c0_i32, %c0_i32_0 : i32, i32
  }
  func.func @transform_2(%arg0: i32) -> (i32, i32) {
    %c0_i32 = arith.constant 0 : i32
    %c0_i32_0 = arith.constant 0 : i32
    %c0_i32_1 = arith.constant 0 : i32
    return %c0_i32, %c0_i32_0 : i32, i32
  }
  func.func @transform_3(%arg0: i32) -> (i32, i32, i32) {
    %c0_i32 = arith.constant 0 : i32
    %c0_i32_0 = arith.constant 0 : i32
    %c0_i32_1 = arith.constant 0 : i32
    return %arg0, %c0_i32, %c0_i32_0 : i32, i32, i32
  }
}

</mosaic_0001>

<llo_original>
// kernel: tpu_custom_call.1
$region0: #{tpu_custom_call.1}
  #allocation0 [shape = 'u32[]', space=smem, size = 0x4, offset = 0x4, fixed_abs, tag = 'smem constant byte address 0x4 - core index']
  #allocation1 [shape = 'u32[144,128]{1,0:T(1,128)}', space=vmem, size = 0x12000, scoped, tag = 'internal scratch']
  #allocation2 [shape = 'f32[8,128]{1,0:T(8,128)}', space=vmem, size = 0x1000, scoped, tag = 'scratch operand']
  %s0 = inlined_call_operand.hbm [shape: f32[8,8,384], index: 0, kind: input, shape index: {}]
  %s1 = inlined_call_operand.hbm [shape: f32[128,384], index: 1, kind: input, shape index: {}]
  %s2 = inlined_call_operand.vmem [shape: f32[1,128], index: 2, kind: input, shape index: {}]
  %s3 = inlined_call_operand.hbm [shape: f32[8,8,128], index: 3, kind: output, shape index: {}]
  %s4 = sld [smem:[#allocation0]]
  $region34: #{tpu_custom_call.1} parent=0
    _
  %s6 = ssub.s32 1, %s4
  %s7 = scalar_select 0, %s6, %s4
  $region1: #{tpu_custom_call.1} parent=0
    #allocation3 [shape = 'u8[98304]{0}', space=vmem, size = 0x18000, scoped, tag = 'input window, operand 0, single buffered']
    #allocation4 [shape = 's32[1]{0}', space=sflag, size = 0x4, scoped, tag = 'scoped memory for tpu_custom_call.1']
    #allocation5 [shape = 's32[1]{0}', space=sflag, size = 0x4, scoped, tag = 'scoped memory for tpu_custom_call.1']
    #allocation6 [shape = 'u8[196608]{0}', space=vmem, size = 0x30000, scoped, tag = 'input window, operand 1, single buffered']
    #allocation7 [shape = 's32[1]{0}', space=sflag, size = 0x4, scoped, tag = 'scoped memory for tpu_custom_call.1']
    #allocation8 [shape = 'u8[32768]{0}', space=vmem, size = 0x8000, scoped, tag = 'output window, operand 0, single buffered']
    %8 = vsyncpa [#allocation4], 0
    %9 = vsyncpa [#allocation7], 0
    %10 = vsyncpa [#allocation5], 0
    // Predicated region
    $region2: #{tpu_custom_call.1} parent=1 // pred_check
      _
    $region3: #{tpu_custom_call.1} parent=1 // pred_check_branch
      %12 = sbr.rel (0) target = $region5
    $region4: #{tpu_custom_call.1} parent=1 // pred_region
      %s14 = ssub.s32 3072, 3072
      %15 = vsyncadd [#allocation4], %s14
      %s16 = sshll.u32 [#allocation3], 4
      %s17 = int_to_ptr.vmem [resolvable:$true] %s16
      %22 = dma.hbm_to_vmem [thread:$0]  %s0, 3072, %s17, [#allocation4], 384, 384, 24
    $region5: #{tpu_custom_call.1} parent=1 // pred_fallthru
      _
    // Predicated region
    $region6: #{tpu_custom_call.1} parent=1 // pred_check
      _
    $region7: #{tpu_custom_call.1} parent=1 // pred_check_branch
      %24 = sbr.rel (0) target = $region9
    $region8: #{tpu_custom_call.1} parent=1 // pred_region
      %s26 = ssub.s32 6144, 6144
      %27 = vsyncadd [#allocation7], %s26
      %s28 = sshll.u32 [#allocation6], 4
      %s29 = int_to_ptr.vmem [resolvable:$true] %s28
      %34 = dma.hbm_to_vmem [thread:$0]  %s1, 6144, %s29, [#allocation7], 384, 384, 24
    $region9: #{tpu_custom_call.1} parent=1 // pred_fallthru
      _
    // Predicated region
    $region10: #{tpu_custom_call.1} parent=1 // pred_check
      _
    $region11: #{tpu_custom_call.1} parent=1 // pred_check_branch
      %36 = sbr.rel (0) target = $region13
    $region12: #{tpu_custom_call.1} parent=1 // pred_region
      _
    $region13: #{tpu_custom_call.1} parent=1 // pred_fallthru
      _
    // Predicated region
    $region14: #{tpu_custom_call.1} parent=1 // pred_check
      _
    $region15: #{tpu_custom_call.1} parent=1 // pred_check_branch
      %38 = sbr.rel (0) target = $region17
    $region16: #{tpu_custom_call.1} parent=1 // pred_region
      %39 = dma.done [#allocation4], 3072
    $region17: #{tpu_custom_call.1} parent=1 // pred_fallthru
      _
    // Predicated region
    $region18: #{tpu_custom_call.1} parent=1 // pred_check
      _
    $region19: #{tpu_custom_call.1} parent=1 // pred_check_branch
      %41 = sbr.rel (0) target = $region21
    $region20: #{tpu_custom_call.1} parent=1 // pred_region
      %42 = dma.done [#allocation7], 6144
    $region21: #{tpu_custom_call.1} parent=1 // pred_fallthru
      _
    %p43 = scmp.eq.s32.totalorder 0, 0
    // Predicated region
    $region22: #{tpu_custom_call.1} parent=1 // pred_check
      %p44 = pneg %p43
    $region23: #{tpu_custom_call.1} parent=1 // pred_check_branch
      %46 = sbr.rel (%p44) target = $region25
    $region24: #{tpu_custom_call.1} parent=1 // pred_region
      %47 = vst [vmem:[#allocation2] sm:$0xff] 1.0
    $region25: #{tpu_custom_call.1} parent=1 // pred_fallthru
      _
    %v48 = vld [vmem:[#allocation6] sm:$0xff]
    %v49 = vld [vmem:[#allocation6 + $0x8] sm:$0xff]
    %v50 = vld [vmem:[#allocation6 + $0x10] sm:$0xff]
    %v51 = vld [vmem:[#allocation6 + $0x18] sm:$0xff]
    %v52 = vld [vmem:[#allocation6 + $0x20] sm:$0xff]
    %v53 = vld [vmem:[#allocation6 + $0x28] sm:$0xff]
    %v54 = vld [vmem:[#allocation6 + $0x30] sm:$0xff]
    %v55 = vld [vmem:[#allocation6 + $0x38] sm:$0xff]
    %v56 = vld [vmem:[#allocation6 + $0x40] sm:$0xff]
    %v57 = vld [vmem:[#allocation6 + $0x48] sm:$0xff]
    %v58 = vld [vmem:[#allocation6 + $0x50] sm:$0xff]
    %v59 = vld [vmem:[#allocation6 + $0x58] sm:$0xff]
    %v60 = vld [vmem:[#allocation6 + $0x60] sm:$0xff]
    %v61 = vld [vmem:[#allocation6 + $0x68] sm:$0xff]
    %v62 = vld [vmem:[#allocation6 + $0x70] sm:$0xff]
    %v63 = vld [vmem:[#allocation6 + $0x78] sm:$0xff]
    %v64 = vld [vmem:[#allocation6 + $0x80] sm:$0xff]
    %v65 = vld [vmem:[#allocation6 + $0x88] sm:$0xff]
    %v66 = vld [vmem:[#allocation6 + $0x90] sm:$0xff]
    %v67 = vld [vmem:[#allocation6 + $0x98] sm:$0xff]
    %v68 = vld [vmem:[#allocation6 + $0xa0] sm:$0xff]
    %v69 = vld [vmem:[#allocation6 + $0xa8] sm:$0xff]
    %v70 = vld [vmem:[#allocation6 + $0xb0] sm:$0xff]
    %v71 = vld [vmem:[#allocation6 + $0xb8] sm:$0xff]
    %v72 = vld [vmem:[#allocation6 + $0xc0] sm:$0xff]
    %v73 = vld [vmem:[#allocation6 + $0xc8] sm:$0xff]
    %v74 = vld [vmem:[#allocation6 + $0xd0] sm:$0xff]
    %v75 = vld [vmem:[#allocation6 + $0xd8] sm:$0xff]
    %v76 = vld [vmem:[#allocation6 + $0xe0] sm:$0xff]
    %v77 = vld [vmem:[#allocation6 + $0xe8] sm:$0xff]
    %v78 = vld [vmem:[#allocation6 + $0xf0] sm:$0xff]
    %v79 = vld [vmem:[#allocation6 + $0xf8] sm:$0xff]
    %v80 = vld [vmem:[#allocation6 + $0x100] sm:$0xff]
    %v81 = vld [vmem:[#allocation6 + $0x108] sm:$0xff]
    %v82 = vld [vmem:[#allocation6 + $0x110] sm:$0xff]
    %v83 = vld [vmem:[#allocation6 + $0x118] sm:$0xff]
    %v84 = vld [vmem:[#allocation6 + $0x120] sm:$0xff]
    %v85 = vld [vmem:[#allocation6 + $0x128] sm:$0xff]
    %v86 = vld [vmem:[#allocation6 + $0x130] sm:$0xff]
    %v87 = vld [vmem:[#allocation6 + $0x138] sm:$0xff]
    %v88 = vld [vmem:[#allocation6 + $0x140] sm:$0xff]
    %v89 = vld [vmem:[#allocation6 + $0x148] sm:$0xff]
    %v90 = vld [vmem:[#allocation6 + $0x150] sm:$0xff]
    %v91 = vld [vmem:[#allocation6 + $0x158] sm:$0xff]
    %v92 = vld [vmem:[#allocation6 + $0x160] sm:$0xff]
    %v93 = vld [vmem:[#allocation6 + $0x168] sm:$0xff]
    %v94 = vld [vmem:[#allocation6 + $0x170] sm:$0xff]
    %v95 = vld [vmem:[#allocation6 + $0x178] sm:$0xff]
    %v96 = vld [vmem:[%s2] sm:$0x1]
    %v98 = vlaneseq
    %v99 = vshrl.u32 %v98, 7
    %v100 = vsub.s32 0, %v99
    %v101 = vrot.slane %v96, %v100
    %v103 = vld [vmem:[#allocation2] sm:$0xff]
    %v104 = vld [vmem:[#allocation3] sm:$0xff]
    %v105 = vld [vmem:[#allocation3 + $0x8] sm:$0xff]
    %v106 = vld [vmem:[#allocation3 + $0x10] sm:$0xff]
    %107 = vmatprep.subr.mxu0 %v49
    %108 = vmatpush1.msra.mxu0 %v48
    %109 = vmatprep.subr.mxu0 %v52
    %110 = vmatpush1.msra.mxu0 %v51
    %111 = vmatprep.subr.mxu0 %v55
    %112 = vmatpush1.msra.mxu0 %v54
    %113 = vmatprep.subr.mxu0 %v58
    %114 = vmatpush1.msra.mxu0 %v57
    %115 = vmatprep.subr.mxu0 %v61
    %116 = vmatpush1.msra.mxu0 %v60
    %117 = vmatprep.subr.mxu0 %v64
    %118 = vmatpush1.msra.mxu0 %v63
    %119 = vmatprep.subr.mxu0 %v67
    %120 = vmatpush1.msra.mxu0 %v66
    %121 = vmatprep.subr.mxu0 %v70
    %122 = vmatpush1.msra.mxu0 %v69
    %123 = vmatprep.subr.mxu0 %v73
    %124 = vmatpush1.msra.mxu0 %v72
    %125 = vmatprep.subr.mxu0 %v76
    %126 = vmatpush1.msra.mxu0 %v75
    %127 = vmatprep.subr.mxu0 %v79
    %128 = vmatpush1.msra.mxu0 %v78
    %129 = vmatprep.subr.mxu0 %v82
    %130 = vmatpush1.msra.mxu0 %v81
    %131 = vmatprep.subr.mxu0 %v85
    %132 = vmatpush1.msra.mxu0 %v84
    %133 = vmatprep.subr.mxu0 %v88
    %134 = vmatpush1.msra.mxu0 %v87
    %135 = vmatprep.subr.mxu0 %v91
    %136 = vmatpush1.msra.mxu0 %v90
    %137 = vmatprep.subr.mxu0 %v94
    %138 = vmatpush1.msra.mxu0 %v93
    %139 = vmatprep.subr.mxu0 0.0
    %140 = vmatpush1.msra.mxu0 0.0
    %141 = vmatprep.subr.mxu0 0.0
    %142 = vmatpush1.msra.mxu0 0.0
    %143 = vmatprep.subr.mxu0 0.0
    %144 = vmatpush1.msra.mxu0 0.0
    %145 = vmatprep.subr.mxu0 0.0
    %146 = vmatpush1.msra.mxu0 0.0
    %147 = vmatprep.subr.mxu0 0.0
    %148 = vmatpush1.msra.mxu0 0.0
    %149 = vmatprep.subr.mxu0 0.0
    %150 = vmatpush1.msra.mxu0 0.0
    %151 = vmatprep.subr.mxu0 0.0
    %152 = vmatpush1.msra.mxu0 0.0
    %153 = vmatprep.subr.mxu0 0.0
    %154 = vmatpush1.msra.mxu0 0.0
    %155 = vmatprep.subr.mxu0 0.0
    %156 = vmatpush1.msra.mxu0 0.0
    %157 = vmatprep.subr.mxu0 0.0
    %158 = vmatpush1.msra.mxu0 0.0
    %159 = vmatprep.subr.mxu0 0.0
    %160 = vmatpush1.msra.mxu0 0.0
    %161 = vmatprep.subr.mxu0 0.0
    %162 = vmatpush1.msra.mxu0 0.0
    %163 = vmatprep.subr.mxu0 0.0
    %164 = vmatpush1.msra.mxu0 0.0
    %165 = vmatprep.subr.mxu0 0.0
    %166 = vmatpush1.msra.mxu0 0.0
    %167 = vmatprep.subr.mxu0 0.0
    %168 = vmatpush1.msra.mxu0 0.0
    %169 = vmatprep.subr.mxu0 0.0
    %170 = vmatpush1.msra.mxu0 0.0
    %171 = vmatprep.mubr.f32.mxu0 0.0
    %172 = vmatmul.mubr.f32.gmra.mrb[0].mxu0 %v103
    %v173 = vpop.f32.mrb[0].mxu0
    %v174 = vadd.f32 0.0, %v173
    %v175 = vpop.f32.mrb[0].mxu0
    %v176 = vadd.f32 0.0, %v175
    %177 = vdwg.mxu0
    %178 = vmatprep.subr.mxu0 0.0
    %179 = vmatpush1.msra.mxu0 %v50
    %180 = vmatprep.subr.mxu0 0.0
    %181 = vmatpush1.msra.mxu0 %v53
    %182 = vmatprep.subr.mxu0 0.0
    %183 = vmatpush1.msra.mxu0 %v56
    %184 = vmatprep.subr.mxu0 0.0
    %185 = vmatpush1.msra.mxu0 %v59
    %186 = vmatprep.subr.mxu0 0.0
    %187 = vmatpush1.msra.mxu0 %v62
    %188 = vmatprep.subr.mxu0 0.0
    %189 = vmatpush1.msra.mxu0 %v65
    %190 = vmatprep.subr.mxu0 0.0
    %191 = vmatpush1.msra.mxu0 %v68
    %192 = vmatprep.subr.mxu0 0.0
    %193 = vmatpush1.msra.mxu0 %v71
    %194 = vmatprep.subr.mxu0 0.0
    %195 = vmatpush1.msra.mxu0 %v74
    %196 = vmatprep.subr.mxu0 0.0
    %197 = vmatpush1.msra.mxu0 %v77
    %198 = vmatprep.subr.mxu0 0.0
    %199 = vmatpush1.msra.mxu0 %v80
    %200 = vmatprep.subr.mxu0 0.0
    %201 = vmatpush1.msra.mxu0 %v83
    %202 = vmatprep.subr.mxu0 0.0
    %203 = vmatpush1.msra.mxu0 %v86
    %204 = vmatprep.subr.mxu0 0.0
    %205 = vmatpush1.msra.mxu0 %v89
    %206 = vmatprep.subr.mxu0 0.0
    %207 = vmatpush1.msra.mxu0 %v92
    %208 = vmatprep.subr.mxu0 0.0
    %209 = vmatpush1.msra.mxu0 %v95
    %210 = vmatprep.subr.mxu0 0.0
    %211 = vmatpush1.msra.mxu0 0.0
    %212 = vmatprep.subr.mxu0 0.0
    %213 = vmatpush1.msra.mxu0 0.0
    %214 = vmatprep.subr.mxu0 0.0
    %215 = vmatpush1.msra.mxu0 0.0
    %216 = vmatprep.subr.mxu0 0.0
    %217 = vmatpush1.msra.mxu0 0.0
    %218 = vmatprep.subr.mxu0 0.0
    %219 = vmatpush1.msra.mxu0 0.0
    %220 = vmatprep.subr.mxu0 0.0
    %221 = vmatpush1.msra.mxu0 0.0
    %222 = vmatprep.subr.mxu0 0.0
    %223 = vmatpush1.msra.mxu0 0.0
    %224 = vmatprep.subr.mxu0 0.0
    %225 = vmatpush1.msra.mxu0 0.0
    %226 = vmatprep.subr.mxu0 0.0
    %227 = vmatpush1.msra.mxu0 0.0
    %228 = vmatprep.subr.mxu0 0.0
    %229 = vmatpush1.msra.mxu0 0.0
    %230 = vmatprep.subr.mxu0 0.0
    %231 = vmatpush1.msra.mxu0 0.0
    %232 = vmatprep.subr.mxu0 0.0
    %233 = vmatpush1.msra.mxu0 0.0
    %234 = vmatprep.subr.mxu0 0.0
    %235 = vmatpush1.msra.mxu0 0.0
    %236 = vmatprep.subr.mxu0 0.0
    %237 = vmatpush1.msra.mxu0 0.0
    %238 = vmatprep.subr.mxu0 0.0
    %239 = vmatpush1.msra.mxu0 0.0
    %240 = vmatprep.subr.mxu0 0.0
    %241 = vmatpush1.msra.mxu0 0.0
    %242 = vmatprep.mubr.f32.mxu0 0.0
    %243 = vmatmul.mubr.f32.gmra.mrb[0].mxu0 %v103
    %v244 = vpop.f32.mrb[0].mxu0
    %v245 = vadd.f32 0.0, %v244
    %v246 = vpop.f32.mrb[0].mxu0
    %247 = vdwg.mxu0
    %v248 = vadd.f32 %v104, %v174
    %v249 = vxor.u32 %v248, 2147483648
    %v250 = vmul.f32 %v249, 1.442695
    %v251 = vpow.pop %v250
    %v252 = vadd.f32 %v251, 1.0
    %v253 = vrcp.pop %v252
    %v254 = vmul.f32 1.0, %v253
    %v255 = vadd.f32 %v105, %v176
    %v256 = vxor.u32 %v255, 2147483648
    %v257 = vmul.f32 %v256, 1.442695
    %v258 = vpow.pop %v257
    %v259 = vadd.f32 %v258, 1.0
    %v260 = vrcp.pop %v259
    %v261 = vmul.f32 1.0, %v260
    %v262 = vadd.f32 %v245, %v101
    %v263 = vmul.f32 %v254, %v262
    %v264 = vadd.f32 %v106, %v263
    %v265 = vtanh.pop %v264
    %v266 = vsub.f32 1.0, %v261
    %v267 = vmul.f32 %v266, %v265
    %v268 = vmul.f32 %v261, %v103
    %v269 = vadd.f32 %v267, %v268
    %270 = vst [vmem:[#allocation8] sm:$0xff] %v269
    %s271 = scalar_lea.vmem [#allocation3], 24
    %v272 = vld [vmem:[%s271] sm:$0xff]
    %v273 = vld [vmem:[%s271 + $0x8] sm:$0xff]
    %v274 = vld [vmem:[%s271 + $0x10] sm:$0xff]
    %275 = vmatprep.subr.mxu0 %v49
    %276 = vmatpush1.msra.mxu0 %v48
    %277 = vmatprep.subr.mxu0 %v52
    %278 = vmatpush1.msra.mxu0 %v51
    %279 = vmatprep.subr.mxu0 %v55
    %280 = vmatpush1.msra.mxu0 %v54
    %281 = vmatprep.subr.mxu0 %v58
    %282 = vmatpush1.msra.mxu0 %v57
    %283 = vmatprep.subr.mxu0 %v61
    %284 = vmatpush1.msra.mxu0 %v60
    %285 = vmatprep.subr.mxu0 %v64
    %286 = vmatpush1.msra.mxu0 %v63
    %287 = vmatprep.subr.mxu0 %v67
    %288 = vmatpush1.msra.mxu0 %v66
    %289 = vmatprep.subr.mxu0 %v70
    %290 = vmatpush1.msra.mxu0 %v69
    %291 = vmatprep.subr.mxu0 %v73
    %292 = vmatpush1.msra.mxu0 %v72
    %293 = vmatprep.subr.mxu0 %v76
    %294 = vmatpush1.msra.mxu0 %v75
    %295 = vmatprep.subr.mxu0 %v79
    %296 = vmatpush1.msra.mxu0 %v78
    %297 = vmatprep.subr.mxu0 %v82
    %298 = vmatpush1.msra.mxu0 %v81
    %299 = vmatprep.subr.mxu0 %v85
    %300 = vmatpush1.msra.mxu0 %v84
    %301 = vmatprep.subr.mxu0 %v88
    %302 = vmatpush1.msra.mxu0 %v87
    %303 = vmatprep.subr.mxu0 %v91
    %304 = vmatpush1.msra.mxu0 %v90
    %305 = vmatprep.subr.mxu0 %v94
    %306 = vmatpush1.msra.mxu0 %v93
    %307 = vmatprep.subr.mxu0 0.0
    %308 = vmatpush1.msra.mxu0 0.0
    %309 = vmatprep.subr.mxu0 0.0
    %310 = vmatpush1.msra.mxu0 0.0
    %311 = vmatprep.subr.mxu0 0.0
    %312 = vmatpush1.msra.mxu0 0.0
    %313 = vmatprep.subr.mxu0 0.0
    %314 = vmatpush1.msra.mxu0 0.0
    %315 = vmatprep.subr.mxu0 0.0
    %316 = vmatpush1.msra.mxu0 0.0
    %317 = vmatprep.subr.mxu0 0.0
    %318 = vmatpush1.msra.mxu0 0.0
    %319 = vmatprep.subr.mxu0 0.0
    %320 = vmatpush1.msra.mxu0 0.0
    %321 = vmatprep.subr.mxu0 0.0
    %322 = vmatpush1.msra.mxu0 0.0
    %323 = vmatprep.subr.mxu0 0.0
    %324 = vmatpush1.msra.mxu0 0.0
    %325 = vmatprep.subr.mxu0 0.0
    %326 = vmatpush1.msra.mxu0 0.0
    %327 = vmatprep.subr.mxu0 0.0
    %328 = vmatpush1.msra.mxu0 0.0
    %329 = vmatprep.subr.mxu0 0.0
    %330 = vmatpush1.msra.mxu0 0.0
    %331 = vmatprep.subr.mxu0 0.0
    %332 = vmatpush1.msra.mxu0 0.0
    %333 = vmatprep.subr.mxu0 0.0
    %334 = vmatpush1.msra.mxu0 0.0
    %335 = vmatprep.subr.mxu0 0.0
    %336 = vmatpush1.msra.mxu0 0.0
    %337 = vmatprep.subr.mxu0 0.0
    %338 = vmatpush1.msra.mxu0 0.0
    %339 = vmatprep.mubr.f32.mxu0 0.0
    %340 = vmatmul.mubr.f32.gmra.mrb[0].mxu0 %v269
    %v341 = vpop.f32.mrb[0].mxu0
    %v342 = vadd.f32 0.0, %v341
    %v343 = vpop.f32.mrb[0].mxu0
    %v344 = vadd.f32 0.0, %v343
    %345 = vdwg.mxu0
    %346 = vmatprep.subr.mxu0 0.0
    %347 = vmatpush1.msra.mxu0 %v50
    %348 = vmatprep.subr.mxu0 0.0
    %349 = vmatpush1.msra.mxu0 %v53
    %350 = vmatprep.subr.mxu0 0.0
    %351 = vmatpush1.msra.mxu0 %v56
    %352 = vmatprep.subr.mxu0 0.0
    %353 = vmatpush1.msra.mxu0 %v59
    %354 = vmatprep.subr.mxu0 0.0
    %355 = vmatpush1.msra.mxu0 %v62
    %356 = vmatprep.subr.mxu0 0.0
    %357 = vmatpush1.msra.mxu0 %v65
    %358 = vmatprep.subr.mxu0 0.0
    %359 = vmatpush1.msra.mxu0 %v68
    %360 = vmatprep.subr.mxu0 0.0
    %361 = vmatpush1.msra.mxu0 %v71
    %362 = vmatprep.subr.mxu0 0.0
    %363 = vmatpush1.msra.mxu0 %v74
    %364 = vmatprep.subr.mxu0 0.0
    %365 = vmatpush1.msra.mxu0 %v77
    %366 = vmatprep.subr.mxu0 0.0
    %367 = vmatpush1.msra.mxu0 %v80
    %368 = vmatprep.subr.mxu0 0.0
    %369 = vmatpush1.msra.mxu0 %v83
    %370 = vmatprep.subr.mxu0 0.0
    %371 = vmatpush1.msra.mxu0 %v86
    %372 = vmatprep.subr.mxu0 0.0
    %373 = vmatpush1.msra.mxu0 %v89
    %374 = vmatprep.subr.mxu0 0.0
    %375 = vmatpush1.msra.mxu0 %v92
    %376 = vmatprep.subr.mxu0 0.0
    %377 = vmatpush1.msra.mxu0 %v95
    %378 = vmatprep.subr.mxu0 0.0
    %379 = vmatpush1.msra.mxu0 0.0
    %380 = vmatprep.subr.mxu0 0.0
    %381 = vmatpush1.msra.mxu0 0.0
    %382 = vmatprep.subr.mxu0 0.0
    %383 = vmatpush1.msra.mxu0 0.0
    %384 = vmatprep.subr.mxu0 0.0
    %385 = vmatpush1.msra.mxu0 0.0
    %386 = vmatprep.subr.mxu0 0.0
    %387 = vmatpush1.msra.mxu0 0.0
    %388 = vmatprep.subr.mxu0 0.0
    %389 = vmatpush1.msra.mxu0 0.0
    %390 = vmatprep.subr.mxu0 0.0
    %391 = vmatpush1.msra.mxu0 0.0
    %392 = vmatprep.subr.mxu0 0.0
    %393 = vmatpush1.msra.mxu0 0.0
    %394 = vmatprep.subr.mxu0 0.0
    %395 = vmatpush1.msra.mxu0 0.0
    %396 = vmatprep.subr.mxu0 0.0
    %397 = vmatpush1.msra.mxu0 0.0
    %398 = vmatprep.subr.mxu0 0.0
    %399 = vmatpush1.msra.mxu0 0.0
    %400 = vmatprep.subr.mxu0 0.0
    %401 = vmatpush1.msra.mxu0 0.0
    %402 = vmatprep.subr.mxu0 0.0
    %403 = vmatpush1.msra.mxu0 0.0
    %404 = vmatprep.subr.mxu0 0.0
    %405 = vmatpush1.msra.mxu0 0.0
    %406 = vmatprep.subr.mxu0 0.0
    %407 = vmatpush1.msra.mxu0 0.0
    %408 = vmatprep.subr.mxu0 0.0
    %409 = vmatpush1.msra.mxu0 0.0
    %410 = vmatprep.mubr.f32.mxu0 0.0
    %411 = vmatmul.mubr.f32.gmra.mrb[0].mxu0 %v269
    %v412 = vpop.f32.mrb[0].mxu0
    %v413 = vadd.f32 0.0, %v412
    %v414 = vpop.f32.mrb[0].mxu0
    %415 = vdwg.mxu0
    %v416 = vadd.f32 %v272, %v342
    %v417 = vxor.u32 %v416, 2147483648
    %v418 = vmul.f32 %v417, 1.442695
    %v419 = vpow.pop %v418
    %v420 = vadd.f32 %v419, 1.0
    %v421 = vrcp.pop %v420
    %v422 = vmul.f32 1.0, %v421
    %v423 = vadd.f32 %v273, %v344
    %v424 = vxor.u32 %v423, 2147483648
    %v425 = vmul.f32 %v424, 1.442695
    %v426 = vpow.pop %v425
    %v427 = vadd.f32 %v426, 1.0
    %v428 = vrcp.pop %v427
    %v429 = vmul.f32 1.0, %v428
    %v430 = vadd.f32 %v413, %v101
    %v431 = vmul.f32 %v422, %v430
    %v432 = vadd.f32 %v274, %v431
    %v433 = vtanh.pop %v432
    %v434 = vsub.f32 1.0, %v429
    %v435 = vmul.f32 %v434, %v433
    %v436 = vmul.f32 %v429, %v269
    %v437 = vadd.f32 %v435, %v436
    %s438 = scalar_lea.vmem [#allocation8], 8
    %439 = vst [vmem:[%s438] sm:$0xff] %v437
    %s440 = scalar_lea.vmem [#allocation3], 48
    %v441 = vld [vmem:[%s440] sm:$0xff]
    %v442 = vld [vmem:[%s440 + $0x8] sm:$0xff]
    %v443 = vld [vmem:[%s440 + $0x10] sm:$0xff]
    %444 = vmatprep.subr.mxu0 %v49
    %445 = vmatpush1.msra.mxu0 %v48
    %446 = vmatprep.subr.mxu0 %v52
    %447 = vmatpush1.msra.mxu0 %v51
    %448 = vmatprep.subr.mxu0 %v55
    %449 = vmatpush1.msra.mxu0 %v54
    %450 = vmatprep.subr.mxu0 %v58
    %451 = vmatpush1.msra.mxu0 %v57
    %452 = vmatprep.subr.mxu0 %v61
    %453 = vmatpush1.msra.mxu0 %v60
    %454 = vmatprep.subr.mxu0 %v64
    %455 = vmatpush1.msra.mxu0 %v63
    %456 = vmatprep.subr.mxu0 %v67
    %457 = vmatpush1.msra.mxu0 %v66
    %458 = vmatprep.subr.mxu0 %v70
    %459 = vmatpush1.msra.mxu0 %v69
    %460 = vmatprep.subr.mxu0 %v73
    %461 = vmatpush1.msra.mxu0 %v72
    %462 = vmatprep.subr.mxu0 %v76
    %463 = vmatpush1.msra.mxu0 %v75
    %464 = vmatprep.subr.mxu0 %v79
    %465 = vmatpush1.msra.mxu0 %v78
    %466 = vmatprep.subr.mxu0 %v82
    %467 = vmatpush1.msra.mxu0 %v81
    %468 = vmatprep.subr.mxu0 %v85
    %469 = vmatpush1.msra.mxu0 %v84
    %470 = vmatprep.subr.mxu0 %v88
    %471 = vmatpush1.msra.mxu0 %v87
    %472 = vmatprep.subr.mxu0 %v91
    %473 = vmatpush1.msra.mxu0 %v90
    %474 = vmatprep.subr.mxu0 %v94
    %475 = vmatpush1.msra.mxu0 %v93
    %476 = vmatprep.subr.mxu0 0.0
    %477 = vmatpush1.msra.mxu0 0.0
    %478 = vmatprep.subr.mxu0 0.0
    %479 = vmatpush1.msra.mxu0 0.0
    %480 = vmatprep.subr.mxu0 0.0
    %481 = vmatpush1.msra.mxu0 0.0
    %482 = vmatprep.subr.mxu0 0.0
    %483 = vmatpush1.msra.mxu0 0.0
    %484 = vmatprep.subr.mxu0 0.0
    %485 = vmatpush1.msra.mxu0 0.0
    %486 = vmatprep.subr.mxu0 0.0
    %487 = vmatpush1.msra.mxu0 0.0
    %488 = vmatprep.subr.mxu0 0.0
    %489 = vmatpush1.msra.mxu0 0.0
    %490 = vmatprep.subr.mxu0 0.0
    %491 = vmatpush1.msra.mxu0 0.0
    %492 = vmatprep.subr.mxu0 0.0
    %493 = vmatpush1.msra.mxu0 0.0
    %494 = vmatprep.subr.mxu0 0.0
    %495 = vmatpush1.msra.mxu0 0.0
    %496 = vmatprep.subr.mxu0 0.0
    %497 = vmatpush1.msra.mxu0 0.0
    %498 = vmatprep.subr.mxu0 0.0
    %499 = vmatpush1.msra.mxu0 0.0
    %500 = vmatprep.subr.mxu0 0.0
    %501 = vmatpush1.msra.mxu0 0.0
    %502 = vmatprep.subr.mxu0 0.0
    %503 = vmatpush1.msra.mxu0 0.0
    %504 = vmatprep.subr.mxu0 0.0
    %505 = vmatpush1.msra.mxu0 0.0
    %506 = vmatprep.subr.mxu0 0.0
    %507 = vmatpush1.msra.mxu0 0.0
    %508 = vmatprep.mubr.f32.mxu0 0.0
    %509 = vmatmul.mubr.f32.gmra.mrb[0].mxu0 %v437
    %v510 = vpop.f32.mrb[0].mxu0
    %v511 = vadd.f32 0.0, %v510
    %v512 = vpop.f32.mrb[0].mxu0
    %v513 = vadd.f32 0.0, %v512
    %514 = vdwg.mxu0
    %515 = vmatprep.subr.mxu0 0.0
    %516 = vmatpush1.msra.mxu0 %v50
    %517 = vmatprep.subr.mxu0 0.0
    %518 = vmatpush1.msra.mxu0 %v53
    %519 = vmatprep.subr.mxu0 0.0
    %520 = vmatpush1.msra.mxu0 %v56
    %521 = vmatprep.subr.mxu0 0.0
    %522 = vmatpush1.msra.mxu0 %v59
    %523 = vmatprep.subr.mxu0 0.0
    %524 = vmatpush1.msra.mxu0 %v62
    %525 = vmatprep.subr.mxu0 0.0
    %526 = vmatpush1.msra.mxu0 %v65
    %527 = vmatprep.subr.mxu0 0.0
    %528 = vmatpush1.msra.mxu0 %v68
    %529 = vmatprep.subr.mxu0 0.0
    %530 = vmatpush1.msra.mxu0 %v71
    %531 = vmatprep.subr.mxu0 0.0
    %532 = vmatpush1.msra.mxu0 %v74
    %533 = vmatprep.subr.mxu0 0.0
    %534 = vmatpush1.msra.mxu0 %v77
    %535 = vmatprep.subr.mxu0 0.0
    %536 = vmatpush1.msra.mxu0 %v80
    %537 = vmatprep.subr.mxu0 0.0
    %538 = vmatpush1.msra.mxu0 %v83
    %539 = vmatprep.subr.mxu0 0.0
    %540 = vmatpush1.msra.mxu0 %v86
    %541 = vmatprep.subr.mxu0 0.0
    %542 = vmatpush1.msra.mxu0 %v89
    %543 = vmatprep.subr.mxu0 0.0
    %544 = vmatpush1.msra.mxu0 %v92
    %545 = vmatprep.subr.mxu0 0.0
    %546 = vmatpush1.msra.mxu0 %v95
    %547 = vmatprep.subr.mxu0 0.0
    %548 = vmatpush1.msra.mxu0 0.0
    %549 = vmatprep.subr.mxu0 0.0
    %550 = vmatpush1.msra.mxu0 0.0
    %551 = vmatprep.subr.mxu0 0.0
    %552 = vmatpush1.msra.mxu0 0.0
    %553 = vmatprep.subr.mxu0 0.0
    %554 = vmatpush1.msra.mxu0 0.0
    %555 = vmatprep.subr.mxu0 0.0
    %556 = vmatpush1.msra.mxu0 0.0
    %557 = vmatprep.subr.mxu0 0.0
    %558 = vmatpush1.msra.mxu0 0.0
    %559 = vmatprep.subr.mxu0 0.0
    %560 = vmatpush1.msra.mxu0 0.0
    %561 = vmatprep.subr.mxu0 0.0
    %562 = vmatpush1.msra.mxu0 0.0
    %563 = vmatprep.subr.mxu0 0.0
    %564 = vmatpush1.msra.mxu0 0.0
    %565 = vmatprep.subr.mxu0 0.0
    %566 = vmatpush1.msra.mxu0 0.0
    %567 = vmatprep.subr.mxu0 0.0
    %568 = vmatpush1.msra.mxu0 0.0
    %569 = vmatprep.subr.mxu0 0.0
    %570 = vmatpush1.msra.mxu0 0.0
    %571 = vmatprep.subr.mxu0 0.0
    %572 = vmatpush1.msra.mxu0 0.0
    %573 = vmatprep.subr.mxu0 0.0
    %574 = vmatpush1.msra.mxu0 0.0
    %575 = vmatprep.subr.mxu0 0.0
    %576 = vmatpush1.msra.mxu0 0.0
    %577 = vmatprep.subr.mxu0 0.0
    %578 = vmatpush1.msra.mxu0 0.0
    %579 = vmatprep.mubr.f32.mxu0 0.0
    %580 = vmatmul.mubr.f32.gmra.mrb[0].mxu0 %v437
    %v581 = vpop.f32.mrb[0].mxu0
    %v582 = vadd.f32 0.0, %v581
    %v583 = vpop.f32.mrb[0].mxu0
    %584 = vdwg.mxu0
    %v585 = vadd.f32 %v441, %v511
    %v586 = vxor.u32 %v585, 2147483648
    %v587 = vmul.f32 %v586, 1.442695
    %v588 = vpow.pop %v587
    %v589 = vadd.f32 %v588, 1.0
    %v590 = vrcp.pop %v589
    %v591 = vmul.f32 1.0, %v590
    %v592 = vadd.f32 %v442, %v513
    %v593 = vxor.u32 %v592, 2147483648
    %v594 = vmul.f32 %v593, 1.442695
    %v595 = vpow.pop %v594
    %v596 = vadd.f32 %v595, 1.0
    %v597 = vrcp.pop %v596
    %v598 = vmul.f32 1.0, %v597
    %v599 = vadd.f32 %v582, %v101
    %v600 = vmul.f32 %v591, %v599
    %v601 = vadd.f32 %v443, %v600
    %v602 = vtanh.pop %v601
    %v603 = vsub.f32 1.0, %v598
    %v604 = vmul.f32 %v603, %v602
    %v605 = vmul.f32 %v598, %v437
    %v606 = vadd.f32 %v604, %v605
    %s607 = scalar_lea.vmem [#allocation8], 16
    %608 = vst [vmem:[%s607] sm:$0xff] %v606
    %s609 = scalar_lea.vmem [#allocation3], 72
    %v610 = vld [vmem:[%s609] sm:$0xff]
    %v611 = vld [vmem:[%s609 + $0x8] sm:$0xff]
    %v612 = vld [vmem:[%s609 + $0x10] sm:$0xff]
    %613 = vmatprep.subr.mxu0 %v49
    %614 = vmatpush1.msra.mxu0 %v48
    %615 = vmatprep.subr.mxu0 %v52
    %616 = vmatpush1.msra.mxu0 %v51
    %617 = vmatprep.subr.mxu0 %v55
    %618 = vmatpush1.msra.mxu0 %v54
    %619 = vmatprep.subr.mxu0 %v58
    %620 = vmatpush1.msra.mxu0 %v57
    %621 = vmatprep.subr.mxu0 %v61
    %622 = vmatpush1.msra.mxu0 %v60
    %623 = vmatprep.subr.mxu0 %v64
    %624 = vmatpush1.msra.mxu0 %v63
    %625 = vmatprep.subr.mxu0 %v67
    %626 = vmatpush1.msra.mxu0 %v66
    %627 = vmatprep.subr.mxu0 %v70
    %628 = vmatpush1.msra.mxu0 %v69
    %629 = vmatprep.subr.mxu0 %v73
    %630 = vmatpush1.msra.mxu0 %v72
    %631 = vmatprep.subr.mxu0 %v76
    %632 = vmatpush1.msra.mxu0 %v75
    %633 = vmatprep.subr.mxu0 %v79
    %634 = vmatpush1.msra.mxu0 %v78
    %635 = vmatprep.subr.mxu0 %v82
    %636 = vmatpush1.msra.mxu0 %v81
    %637 = vmatprep.subr.mxu0 %v85
    %638 = vmatpush1.msra.mxu0 %v84
    %639 = vmatprep.subr.mxu0 %v88
    %640 = vmatpush1.msra.mxu0 %v87
    %641 = vmatprep.subr.mxu0 %v91
    %642 = vmatpush1.msra.mxu0 %v90
    %643 = vmatprep.subr.mxu0 %v94
    %644 = vmatpush1.msra.mxu0 %v93
    %645 = vmatprep.subr.mxu0 0.0
    %646 = vmatpush1.msra.mxu0 0.0
    %647 = vmatprep.subr.mxu0 0.0
    %648 = vmatpush1.msra.mxu0 0.0
    %649 = vmatprep.subr.mxu0 0.0
    %650 = vmatpush1.msra.mxu0 0.0
    %651 = vmatprep.subr.mxu0 0.0
    %652 = vmatpush1.msra.mxu0 0.0
    %653 = vmatprep.subr.mxu0 0.0
    %654 = vmatpush1.msra.mxu0 0.0
    %655 = vmatprep.subr.mxu0 0.0
    %656 = vmatpush1.msra.mxu0 0.0
    %657 = vmatprep.subr.mxu0 0.0
    %658 = vmatpush1.msra.mxu0 0.0
    %659 = vmatprep.subr.mxu0 0.0
    %660 = vmatpush1.msra.mxu0 0.0
    %661 = vmatprep.subr.mxu0 0.0
    %662 = vmatpush1.msra.mxu0 0.0
    %663 = vmatprep.subr.mxu0 0.0
    %664 = vmatpush1.msra.mxu0 0.0
    %665 = vmatprep.subr.mxu0 0.0
    %666 = vmatpush1.msra.mxu0 0.0
    %667 = vmatprep.subr.mxu0 0.0
    %668 = vmatpush1.msra.mxu0 0.0
    %669 = vmatprep.subr.mxu0 0.0
    %670 = vmatpush1.msra.mxu0 0.0
    %671 = vmatprep.subr.mxu0 0.0
    %672 = vmatpush1.msra.mxu0 0.0
    %673 = vmatprep.subr.mxu0 0.0
    %674 = vmatpush1.msra.mxu0 0.0
    %675 = vmatprep.subr.mxu0 0.0
    %676 = vmatpush1.msra.mxu0 0.0
    %677 = vmatprep.mubr.f32.mxu0 0.0
    %678 = vmatmul.mubr.f32.gmra.mrb[0].mxu0 %v606
    %v679 = vpop.f32.mrb[0].mxu0
    %v680 = vadd.f32 0.0, %v679
    %v681 = vpop.f32.mrb[0].mxu0
    %v682 = vadd.f32 0.0, %v681
    %683 = vdwg.mxu0
    %684 = vmatprep.subr.mxu0 0.0
    %685 = vmatpush1.msra.mxu0 %v50
    %686 = vmatprep.subr.mxu0 0.0
    %687 = vmatpush1.msra.mxu0 %v53
    %688 = vmatprep.subr.mxu0 0.0
    %689 = vmatpush1.msra.mxu0 %v56
    %690 = vmatprep.subr.mxu0 0.0
    %691 = vmatpush1.msra.mxu0 %v59
    %692 = vmatprep.subr.mxu0 0.0
    %693 = vmatpush1.msra.mxu0 %v62
    %694 = vmatprep.subr.mxu0 0.0
    %695 = vmatpush1.msra.mxu0 %v65
    %696 = vmatprep.subr.mxu0 0.0
    %697 = vmatpush1.msra.mxu0 %v68
    %698 = vmatprep.subr.mxu0 0.0
    %699 = vmatpush1.msra.mxu0 %v71
    %700 = vmatprep.subr.mxu0 0.0
    %701 = vmatpush1.msra.mxu0 %v74
    %702 = vmatprep.subr.mxu0 0.0
    %703 = vmatpush1.msra.mxu0 %v77
    %704 = vmatprep.subr.mxu0 0.0
    %705 = vmatpush1.msra.mxu0 %v80
    %706 = vmatprep.subr.mxu0 0.0
    %707 = vmatpush1.msra.mxu0 %v83
    %708 = vmatprep.subr.mxu0 0.0
    %709 = vmatpush1.msra.mxu0 %v86
    %710 = vmatprep.subr.mxu0 0.0
    %711 = vmatpush1.msra.mxu0 %v89
    %712 = vmatprep.subr.mxu0 0.0
    %713 = vmatpush1.msra.mxu0 %v92
    %714 = vmatprep.subr.mxu0 0.0
    %715 = vmatpush1.msra.mxu0 %v95
    %716 = vmatprep.subr.mxu0 0.0
    %717 = vmatpush1.msra.mxu0 0.0
    %718 = vmatprep.subr.mxu0 0.0
    %719 = vmatpush1.msra.mxu0 0.0
    %720 = vmatprep.subr.mxu0 0.0
    %721 = vmatpush1.msra.mxu0 0.0
    %722 = vmatprep.subr.mxu0 0.0
    %723 = vmatpush1.msra.mxu0 0.0
    %724 = vmatprep.subr.mxu0 0.0
    %725 = vmatpush1.msra.mxu0 0.0
    %726 = vmatprep.subr.mxu0 0.0
    %727 = vmatpush1.msra.mxu0 0.0
    %728 = vmatprep.subr.mxu0 0.0
    %729 = vmatpush1.msra.mxu0 0.0
    %730 = vmatprep.subr.mxu0 0.0
    %731 = vmatpush1.msra.mxu0 0.0
    %732 = vmatprep.subr.mxu0 0.0
    %733 = vmatpush1.msra.mxu0 0.0
    %734 = vmatprep.subr.mxu0 0.0
    %735 = vmatpush1.msra.mxu0 0.0
    %736 = vmatprep.subr.mxu0 0.0
    %737 = vmatpush1.msra.mxu0 0.0
    %738 = vmatprep.subr.mxu0 0.0
    %739 = vmatpush1.msra.mxu0 0.0
    %740 = vmatprep.subr.mxu0 0.0
    %741 = vmatpush1.msra.mxu0 0.0
    %742 = vmatprep.subr.mxu0 0.0
    %743 = vmatpush1.msra.mxu0 0.0
    %744 = vmatprep.subr.mxu0 0.0
    %745 = vmatpush1.msra.mxu0 0.0
    %746 = vmatprep.subr.mxu0 0.0
    %747 = vmatpush1.msra.mxu0 0.0
    %748 = vmatprep.mubr.f32.mxu0 0.0
    %749 = vmatmul.mubr.f32.gmra.mrb[0].mxu0 %v606
    %v750 = vpop.f32.mrb[0].mxu0
    %v751 = vadd.f32 0.0, %v750
    %v752 = vpop.f32.mrb[0].mxu0
    %753 = vdwg.mxu0
    %v754 = vadd.f32 %v610, %v680
    %v755 = vxor.u32 %v754, 2147483648
    %v756 = vmul.f32 %v755, 1.442695
    %v757 = vpow.pop %v756
    %v758 = vadd.f32 %v757, 1.0
    %v759 = vrcp.pop %v758
    %v760 = vmul.f32 1.0, %v759
    %v761 = vadd.f32 %v611, %v682
    %v762 = vxor.u32 %v761, 2147483648
    %v763 = vmul.f32 %v762, 1.442695
    %v764 = vpow.pop %v763
    %v765 = vadd.f32 %v764, 1.0
    %v766 = vrcp.pop %v765
    %v767 = vmul.f32 1.0, %v766
    %v768 = vadd.f32 %v751, %v101
    %v769 = vmul.f32 %v760, %v768
    %v770 = vadd.f32 %v612, %v769
    %v771 = vtanh.pop %v770
    %v772 = vsub.f32 1.0, %v767
    %v773 = vmul.f32 %v772, %v771
    %v774 = vmul.f32 %v767, %v606
    %v775 = vadd.f32 %v773, %v774
    %s776 = scalar_lea.vmem [#allocation8], 24
    %777 = vst [vmem:[%s776] sm:$0xff] %v775
    %s778 = scalar_lea.vmem [#allocation3], 96
    %v779 = vld [vmem:[%s778] sm:$0xff]
    %v780 = vld [vmem:[%s778 + $0x8] sm:$0xff]
    %v781 = vld [vmem:[%s778 + $0x10] sm:$0xff]
    %782 = vmatprep.subr.mxu0 %v49
    %783 = vmatpush1.msra.mxu0 %v48
    %784 = vmatprep.subr.mxu0 %v52
    %785 = vmatpush1.msra.mxu0 %v51
    %786 = vmatprep.subr.mxu0 %v55
    %787 = vmatpush1.msra.mxu0 %v54
    %788 = vmatprep.subr.mxu0 %v58
    %789 = vmatpush1.msra.mxu0 %v57
    %790 = vmatprep.subr.mxu0 %v61
    %791 = vmatpush1.msra.mxu0 %v60
    %792 = vmatprep.subr.mxu0 %v64
    %793 = vmatpush1.msra.mxu0 %v63
    %794 = vmatprep.subr.mxu0 %v67
    %795 = vmatpush1.msra.mxu0 %v66
    %796 = vmatprep.subr.mxu0 %v70
    %797 = vmatpush1.msra.mxu0 %v69
    %798 = vmatprep.subr.mxu0 %v73
    %799 = vmatpush1.msra.mxu0 %v72
    %800 = vmatprep.subr.mxu0 %v76
    %801 = vmatpush1.msra.mxu0 %v75
    %802 = vmatprep.subr.mxu0 %v79
    %803 = vmatpush1.msra.mxu0 %v78
    %804 = vmatprep.subr.mxu0 %v82
    %805 = vmatpush1.msra.mxu0 %v81
    %806 = vmatprep.subr.mxu0 %v85
    %807 = vmatpush1.msra.mxu0 %v84
    %808 = vmatprep.subr.mxu0 %v88
    %809 = vmatpush1.msra.mxu0 %v87
    %810 = vmatprep.subr.mxu0 %v91
    %811 = vmatpush1.msra.mxu0 %v90
    %812 = vmatprep.subr.mxu0 %v94
    %813 = vmatpush1.msra.mxu0 %v93
    %814 = vmatprep.subr.mxu0 0.0
    %815 = vmatpush1.msra.mxu0 0.0
    %816 = vmatprep.subr.mxu0 0.0
    %817 = vmatpush1.msra.mxu0 0.0
    %818 = vmatprep.subr.mxu0 0.0
    %819 = vmatpush1.msra.mxu0 0.0
    %820 = vmatprep.subr.mxu0 0.0
    %821 = vmatpush1.msra.mxu0 0.0
    %822 = vmatprep.subr.mxu0 0.0
    %823 = vmatpush1.msra.mxu0 0.0
    %824 = vmatprep.subr.mxu0 0.0
    %825 = vmatpush1.msra.mxu0 0.0
    %826 = vmatprep.subr.mxu0 0.0
    %827 = vmatpush1.msra.mxu0 0.0
    %828 = vmatprep.subr.mxu0 0.0
    %829 = vmatpush1.msra.mxu0 0.0
    %830 = vmatprep.subr.mxu0 0.0
    %831 = vmatpush1.msra.mxu0 0.0
    %832 = vmatprep.subr.mxu0 0.0
    %833 = vmatpush1.msra.mxu0 0.0
    %834 = vmatprep.subr.mxu0 0.0
    %835 = vmatpush1.msra.mxu0 0.0
    %836 = vmatprep.subr.mxu0 0.0
    %837 = vmatpush1.msra.mxu0 0.0
    %838 = vmatprep.subr.mxu0 0.0
    %839 = vmatpush1.msra.mxu0 0.0
    %840 = vmatprep.subr.mxu0 0.0
    %841 = vmatpush1.msra.mxu0 0.0
    %842 = vmatprep.subr.mxu0 0.0
    %843 = vmatpush1.msra.mxu0 0.0
    %844 = vmatprep.subr.mxu0 0.0
    %845 = vmatpush1.msra.mxu0 0.0
    %846 = vmatprep.mubr.f32.mxu0 0.0
    %847 = vmatmul.mubr.f32.gmra.mrb[0].mxu0 %v775
    %v848 = vpop.f32.mrb[0].mxu0
    %v849 = vadd.f32 0.0, %v848
    %v850 = vpop.f32.mrb[0].mxu0
    %v851 = vadd.f32 0.0, %v850
    %852 = vdwg.mxu0
    %853 = vmatprep.subr.mxu0 0.0
    %854 = vmatpush1.msra.mxu0 %v50
    %855 = vmatprep.subr.mxu0 0.0
    %856 = vmatpush1.msra.mxu0 %v53
    %857 = vmatprep.subr.mxu0 0.0
    %858 = vmatpush1.msra.mxu0 %v56
    %859 = vmatprep.subr.mxu0 0.0
    %860 = vmatpush1.msra.mxu0 %v59
    %861 = vmatprep.subr.mxu0 0.0
    %862 = vmatpush1.msra.mxu0 %v62
    %863 = vmatprep.subr.mxu0 0.0
    %864 = vmatpush1.msra.mxu0 %v65
    %865 = vmatprep.subr.mxu0 0.0
    %866 = vmatpush1.msra.mxu0 %v68
    %867 = vmatprep.subr.mxu0 0.0
    %868 = vmatpush1.msra.mxu0 %v71
    %869 = vmatprep.subr.mxu0 0.0
    %870 = vmatpush1.msra.mxu0 %v74
    %871 = vmatprep.subr.mxu0 0.0
    %872 = vmatpush1.msra.mxu0 %v77
    %873 = vmatprep.subr.mxu0 0.0
    %874 = vmatpush1.msra.mxu0 %v80
    %875 = vmatprep.subr.mxu0 0.0
    %876 = vmatpush1.msra.mxu0 %v83
    %877 = vmatprep.subr.mxu0 0.0
    %878 = vmatpush1.msra.mxu0 %v86
    %879 = vmatprep.subr.mxu0 0.0
    %880 = vmatpush1.msra.mxu0 %v89
    %881 = vmatprep.subr.mxu0 0.0
    %882 = vmatpush1.msra.mxu0 %v92
    %883 = vmatprep.subr.mxu0 0.0
    %884 = vmatpush1.msra.mxu0 %v95
    %885 = vmatprep.subr.mxu0 0.0
    %886 = vmatpush1.msra.mxu0 0.0
    %887 = vmatprep.subr.mxu0 0.0
    %888 = vmatpush1.msra.mxu0 0.0
    %889 = vmatprep.subr.mxu0 0.0
    %890 = vmatpush1.msra.mxu0 0.0
    %891 = vmatprep.subr.mxu0 0.0
    %892 = vmatpush1.msra.mxu0 0.0
    %893 = vmatprep.subr.mxu0 0.0
    %894 = vmatpush1.msra.mxu0 0.0
    %895 = vmatprep.subr.mxu0 0.0
    %896 = vmatpush1.msra.mxu0 0.0
    %897 = vmatprep.subr.mxu0 0.0
    %898 = vmatpush1.msra.mxu0 0.0
    %899 = vmatprep.subr.mxu0 0.0
    %900 = vmatpush1.msra.mxu0 0.0
    %901 = vmatprep.subr.mxu0 0.0
    %902 = vmatpush1.msra.mxu0 0.0
    %903 = vmatprep.subr.mxu0 0.0
    %904 = vmatpush1.msra.mxu0 0.0
    %905 = vmatprep.subr.mxu0 0.0
    %906 = vmatpush1.msra.mxu0 0.0
    %907 = vmatprep.subr.mxu0 0.0
    %908 = vmatpush1.msra.mxu0 0.0
    %909 = vmatprep.subr.mxu0 0.0
    %910 = vmatpush1.msra.mxu0 0.0
    %911 = vmatprep.subr.mxu0 0.0
    %912 = vmatpush1.msra.mxu0 0.0
    %913 = vmatprep.subr.mxu0 0.0
    %914 = vmatpush1.msra.mxu0 0.0
    %915 = vmatprep.subr.mxu0 0.0
    %916 = vmatpush1.msra.mxu0 0.0
    %917 = vmatprep.mubr.f32.mxu0 0.0
    %918 = vmatmul.mubr.f32.gmra.mrb[0].mxu0 %v775
    %v919 = vpop.f32.mrb[0].mxu0
    %v920 = vadd.f32 0.0, %v919
    %v921 = vpop.f32.mrb[0].mxu0
    %922 = vdwg.mxu0
    %v923 = vadd.f32 %v779, %v849
    %v924 = vxor.u32 %v923, 2147483648
    %v925 = vmul.f32 %v924, 1.442695
    %v926 = vpow.pop %v925
    %v927 = vadd.f32 %v926, 1.0
    %v928 = vrcp.pop %v927
    %v929 = vmul.f32 1.0, %v928
    %v930 = vadd.f32 %v780, %v851
    %v931 = vxor.u32 %v930, 2147483648
    %v932 = vmul.f32 %v931, 1.442695
    %v933 = vpow.pop %v932
    %v934 = vadd.f32 %v933, 1.0
    %v935 = vrcp.pop %v934
    %v936 = vmul.f32 1.0, %v935
    %v937 = vadd.f32 %v920, %v101
    %v938 = vmul.f32 %v929, %v937
    %v939 = vadd.f32 %v781, %v938
    %v940 = vtanh.pop %v939
    %v941 = vsub.f32 1.0, %v936
    %v942 = vmul.f32 %v941, %v940
    %v943 = vmul.f32 %v936, %v775
    %v944 = vadd.f32 %v942, %v943
    %s945 = scalar_lea.vmem [#allocation8], 32
    %946 = vst [vmem:[%s945] sm:$0xff] %v944
    %s947 = scalar_lea.vmem [#allocation3], 120
    %v948 = vld [vmem:[%s947] sm:$0xff]
    %v949 = vld [vmem:[%s947 + $0x8] sm:$0xff]
    %v950 = vld [vmem:[%s947 + $0x10] sm:$0xff]
    %951 = vmatprep.subr.mxu0 %v49
    %952 = vmatpush1.msra.mxu0 %v48
    %953 = vmatprep.subr.mxu0 %v52
    %954 = vmatpush1.msra.mxu0 %v51
    %955 = vmatprep.subr.mxu0 %v55
    %956 = vmatpush1.msra.mxu0 %v54
    %957 = vmatprep.subr.mxu0 %v58
    %958 = vmatpush1.msra.mxu0 %v57
    %959 = vmatprep.subr.mxu0 %v61
    %960 = vmatpush1.msra.mxu0 %v60
    %961 = vmatprep.subr.mxu0 %v64
    %962 = vmatpush1.msra.mxu0 %v63
    %963 = vmatprep.subr.mxu0 %v67
    %964 = vmatpush1.msra.mxu0 %v66
    %965 = vmatprep.subr.mxu0 %v70
    %966 = vmatpush1.msra.mxu0 %v69
    %967 = vmatprep.subr.mxu0 %v73
    %968 = vmatpush1.msra.mxu0 %v72
    %969 = vmatprep.subr.mxu0 %v76
    %970 = vmatpush1.msra.mxu0 %v75
    %971 = vmatprep.subr.mxu0 %v79
    %972 = vmatpush1.msra.mxu0 %v78
    %973 = vmatprep.subr.mxu0 %v82
    %974 = vmatpush1.msra.mxu0 %v81
    %975 = vmatprep.subr.mxu0 %v85
    %976 = vmatpush1.msra.mxu0 %v84
    %977 = vmatprep.subr.mxu0 %v88
    %978 = vmatpush1.msra.mxu0 %v87
    %979 = vmatprep.subr.mxu0 %v91
    %980 = vmatpush1.msra.mxu0 %v90
    %981 = vmatprep.subr.mxu0 %v94
    %982 = vmatpush1.msra.mxu0 %v93
    %983 = vmatprep.subr.mxu0 0.0
    %984 = vmatpush1.msra.mxu0 0.0
    %985 = vmatprep.subr.mxu0 0.0
    %986 = vmatpush1.msra.mxu0 0.0
    %987 = vmatprep.subr.mxu0 0.0
    %988 = vmatpush1.msra.mxu0 0.0
    %989 = vmatprep.subr.mxu0 0.0
    %990 = vmatpush1.msra.mxu0 0.0
    %991 = vmatprep.subr.mxu0 0.0
    %992 = vmatpush1.msra.mxu0 0.0
    %993 = vmatprep.subr.mxu0 0.0
    %994 = vmatpush1.msra.mxu0 0.0
    %995 = vmatprep.subr.mxu0 0.0
    %996 = vmatpush1.msra.mxu0 0.0
    %997 = vmatprep.subr.mxu0 0.0
    %998 = vmatpush1.msra.mxu0 0.0
    %999 = vmatprep.subr.mxu0 0.0
    %1000 = vmatpush1.msra.mxu0 0.0
    %1001 = vmatprep.subr.mxu0 0.0
    %1002 = vmatpush1.msra.mxu0 0.0
    %1003 = vmatprep.subr.mxu0 0.0
    %1004 = vmatpush1.msra.mxu0 0.0
    %1005 = vmatprep.subr.mxu0 0.0
    %1006 = vmatpush1.msra.mxu0 0.0
    %1007 = vmatprep.subr.mxu0 0.0
    %1008 = vmatpush1.msra.mxu0 0.0
    %1009 = vmatprep.subr.mxu0 0.0
    %1010 = vmatpush1.msra.mxu0 0.0
    %1011 = vmatprep.subr.mxu0 0.0
    %1012 = vmatpush1.msra.mxu0 0.0
    %1013 = vmatprep.subr.mxu0 0.0
    %1014 = vmatpush1.msra.mxu0 0.0
    %1015 = vmatprep.mubr.f32.mxu0 0.0
    %1016 = vmatmul.mubr.f32.gmra.mrb[0].mxu0 %v944
    %v1017 = vpop.f32.mrb[0].mxu0
    %v1018 = vadd.f32 0.0, %v1017
    %v1019 = vpop.f32.mrb[0].mxu0
    %v1020 = vadd.f32 0.0, %v1019
    %1021 = vdwg.mxu0
    %1022 = vmatprep.subr.mxu0 0.0
    %1023 = vmatpush1.msra.mxu0 %v50
    %1024 = vmatprep.subr.mxu0 0.0
    %1025 = vmatpush1.msra.mxu0 %v53
    %1026 = vmatprep.subr.mxu0 0.0
    %1027 = vmatpush1.msra.mxu0 %v56
    %1028 = vmatprep.subr.mxu0 0.0
    %1029 = vmatpush1.msra.mxu0 %v59
    %1030 = vmatprep.subr.mxu0 0.0
    %1031 = vmatpush1.msra.mxu0 %v62
    %1032 = vmatprep.subr.mxu0 0.0
    %1033 = vmatpush1.msra.mxu0 %v65
    %1034 = vmatprep.subr.mxu0 0.0
    %1035 = vmatpush1.msra.mxu0 %v68
    %1036 = vmatprep.subr.mxu0 0.0
    %1037 = vmatpush1.msra.mxu0 %v71
    %1038 = vmatprep.subr.mxu0 0.0
    %1039 = vmatpush1.msra.mxu0 %v74
    %1040 = vmatprep.subr.mxu0 0.0
    %1041 = vmatpush1.msra.mxu0 %v77
    %1042 = vmatprep.subr.mxu0 0.0
    %1043 = vmatpush1.msra.mxu0 %v80
    %1044 = vmatprep.subr.mxu0 0.0
    %1045 = vmatpush1.msra.mxu0 %v83
    %1046 = vmatprep.subr.mxu0 0.0
    %1047 = vmatpush1.msra.mxu0 %v86
    %1048 = vmatprep.subr.mxu0 0.0
    %1049 = vmatpush1.msra.mxu0 %v89
    %1050 = vmatprep.subr.mxu0 0.0
    %1051 = vmatpush1.msra.mxu0 %v92
    %1052 = vmatprep.subr.mxu0 0.0
    %1053 = vmatpush1.msra.mxu0 %v95
    %1054 = vmatprep.subr.mxu0 0.0
    %1055 = vmatpush1.msra.mxu0 0.0
    %1056 = vmatprep.subr.mxu0 0.0
    %1057 = vmatpush1.msra.mxu0 0.0
    %1058 = vmatprep.subr.mxu0 0.0
    %1059 = vmatpush1.msra.mxu0 0.0
    %1060 = vmatprep.subr.mxu0 0.0
    %1061 = vmatpush1.msra.mxu0 0.0
    %1062 = vmatprep.subr.mxu0 0.0
    %1063 = vmatpush1.msra.mxu0 0.0
    %1064 = vmatprep.subr.mxu0 0.0
    %1065 = vmatpush1.msra.mxu0 0.0
    %1066 = vmatprep.subr.mxu0 0.0
    %1067 = vmatpush1.msra.mxu0 0.0
    %1068 = vmatprep.subr.mxu0 0.0
    %1069 = vmatpush1.msra.mxu0 0.0
    %1070 = vmatprep.subr.mxu0 0.0
    %1071 = vmatpush1.msra.mxu0 0.0
    %1072 = vmatprep.subr.mxu0 0.0
    %1073 = vmatpush1.msra.mxu0 0.0
    %1074 = vmatprep.subr.mxu0 0.0
    %1075 = vmatpush1.msra.mxu0 0.0
    %1076 = vmatprep.subr.mxu0 0.0
    %1077 = vmatpush1.msra.mxu0 0.0
    %1078 = vmatprep.subr.mxu0 0.0
    %1079 = vmatpush1.msra.mxu0 0.0
    %1080 = vmatprep.subr.mxu0 0.0
    %1081 = vmatpush1.msra.mxu0 0.0
    %1082 = vmatprep.subr.mxu0 0.0
    %1083 = vmatpush1.msra.mxu0 0.0
    %1084 = vmatprep.subr.mxu0 0.0
    %1085 = vmatpush1.msra.mxu0 0.0
    %1086 = vmatprep.mubr.f32.mxu0 0.0
    %1087 = vmatmul.mubr.f32.gmra.mrb[0].mxu0 %v944
    %v1088 = vpop.f32.mrb[0].mxu0
    %v1089 = vadd.f32 0.0, %v1088
    %v1090 = vpop.f32.mrb[0].mxu0
    %1091 = vdwg.mxu0
    %v1092 = vadd.f32 %v948, %v1018
    %v1093 = vxor.u32 %v1092, 2147483648
    %v1094 = vmul.f32 %v1093, 1.442695
    %v1095 = vpow.pop %v1094
    %v1096 = vadd.f32 %v1095, 1.0
    %v1097 = vrcp.pop %v1096
    %v1098 = vmul.f32 1.0, %v1097
    %v1099 = vadd.f32 %v949, %v1020
    %v1100 = vxor.u32 %v1099, 2147483648
    %v1101 = vmul.f32 %v1100, 1.442695
    %v1102 = vpow.pop %v1101
    %v1103 = vadd.f32 %v1102, 1.0
    %v1104 = vrcp.pop %v1103
    %v1105 = vmul.f32 1.0, %v1104
    %v1106 = vadd.f32 %v1089, %v101
    %v1107 = vmul.f32 %v1098, %v1106
    %v1108 = vadd.f32 %v950, %v1107
    %v1109 = vtanh.pop %v1108
    %v1110 = vsub.f32 1.0, %v1105
    %v1111 = vmul.f32 %v1110, %v1109
    %v1112 = vmul.f32 %v1105, %v944
    %v1113 = vadd.f32 %v1111, %v1112
    %s1114 = scalar_lea.vmem [#allocation8], 40
    %1115 = vst [vmem:[%s1114] sm:$0xff] %v1113
    %s1116 = scalar_lea.vmem [#allocation3], 144
    %v1117 = vld [vmem:[%s1116] sm:$0xff]
    %v1118 = vld [vmem:[%s1116 + $0x8] sm:$0xff]
    %v1119 = vld [vmem:[%s1116 + $0x10] sm:$0xff]
    %1120 = vmatprep.subr.mxu0 %v49
    %1121 = vmatpush1.msra.mxu0 %v48
    %1122 = vmatprep.subr.mxu0 %v52
    %1123 = vmatpush1.msra.mxu0 %v51
    %1124 = vmatprep.subr.mxu0 %v55
    %1125 = vmatpush1.msra.mxu0 %v54
    %1126 = vmatprep.subr.mxu0 %v58
    %1127 = vmatpush1.msra.mxu0 %v57
    %1128 = vmatprep.subr.mxu0 %v61
    %1129 = vmatpush1.msra.mxu0 %v60
    %1130 = vmatprep.subr.mxu0 %v64
    %1131 = vmatpush1.msra.mxu0 %v63
    %1132 = vmatprep.subr.mxu0 %v67
    %1133 = vmatpush1.msra.mxu0 %v66
    %1134 = vmatprep.subr.mxu0 %v70
    %1135 = vmatpush1.msra.mxu0 %v69
    %1136 = vmatprep.subr.mxu0 %v73
    %1137 = vmatpush1.msra.mxu0 %v72
    %1138 = vmatprep.subr.mxu0 %v76
    %1139 = vmatpush1.msra.mxu0 %v75
    %1140 = vmatprep.subr.mxu0 %v79
    %1141 = vmatpush1.msra.mxu0 %v78
    %1142 = vmatprep.subr.mxu0 %v82
    %1143 = vmatpush1.msra.mxu0 %v81
    %1144 = vmatprep.subr.mxu0 %v85
    %1145 = vmatpush1.msra.mxu0 %v84
    %1146 = vmatprep.subr.mxu0 %v88
    %1147 = vmatpush1.msra.mxu0 %v87
    %1148 = vmatprep.subr.mxu0 %v91
    %1149 = vmatpush1.msra.mxu0 %v90
    %1150 = vmatprep.subr.mxu0 %v94
    %1151 = vmatpush1.msra.mxu0 %v93
    %1152 = vmatprep.subr.mxu0 0.0
    %1153 = vmatpush1.msra.mxu0 0.0
    %1154 = vmatprep.subr.mxu0 0.0
    %1155 = vmatpush1.msra.mxu0 0.0
    %1156 = vmatprep.subr.mxu0 0.0
    %1157 = vmatpush1.msra.mxu0 0.0
    %1158 = vmatprep.subr.mxu0 0.0
    %1159 = vmatpush1.msra.mxu0 0.0
    %1160 = vmatprep.subr.mxu0 0.0
    %1161 = vmatpush1.msra.mxu0 0.0
    %1162 = vmatprep.subr.mxu0 0.0
    %1163 = vmatpush1.msra.mxu0 0.0
    %1164 = vmatprep.subr.mxu0 0.0
    %1165 = vmatpush1.msra.mxu0 0.0
    %1166 = vmatprep.subr.mxu0 0.0
    %1167 = vmatpush1.msra.mxu0 0.0
    %1168 = vmatprep.subr.mxu0 0.0
    %1169 = vmatpush1.msra.mxu0 0.0
    %1170 = vmatprep.subr.mxu0 0.0
    %1171 = vmatpush1.msra.mxu0 0.0
    %1172 = vmatprep.subr.mxu0 0.0
    %1173 = vmatpush1.msra.mxu0 0.0
    %1174 = vmatprep.subr.mxu0 0.0
    %1175 = vmatpush1.msra.mxu0 0.0
    %1176 = vmatprep.subr.mxu0 0.0
    %1177 = vmatpush1.msra.mxu0 0.0
    %1178 = vmatprep.subr.mxu0 0.0
    %1179 = vmatpush1.msra.mxu0 0.0
    %1180 = vmatprep.subr.mxu0 0.0
    %1181 = vmatpush1.msra.mxu0 0.0
    %1182 = vmatprep.subr.mxu0 0.0
    %1183 = vmatpush1.msra.mxu0 0.0
    %1184 = vmatprep.mubr.f32.mxu0 0.0
    %1185 = vmatmul.mubr.f32.gmra.mrb[0].mxu0 %v1113
    %v1186 = vpop.f32.mrb[0].mxu0
    %v1187 = vadd.f32 0.0, %v1186
    %v1188 = vpop.f32.mrb[0].mxu0
    %v1189 = vadd.f32 0.0, %v1188
    %1190 = vdwg.mxu0
    %1191 = vmatprep.subr.mxu0 0.0
    %1192 = vmatpush1.msra.mxu0 %v50
    %1193 = vmatprep.subr.mxu0 0.0
    %1194 = vmatpush1.msra.mxu0 %v53
    %1195 = vmatprep.subr.mxu0 0.0
    %1196 = vmatpush1.msra.mxu0 %v56
    %1197 = vmatprep.subr.mxu0 0.0
    %1198 = vmatpush1.msra.mxu0 %v59
    %1199 = vmatprep.subr.mxu0 0.0
    %1200 = vmatpush1.msra.mxu0 %v62
    %1201 = vmatprep.subr.mxu0 0.0
    %1202 = vmatpush1.msra.mxu0 %v65
    %1203 = vmatprep.subr.mxu0 0.0
    %1204 = vmatpush1.msra.mxu0 %v68
    %1205 = vmatprep.subr.mxu0 0.0
    %1206 = vmatpush1.msra.mxu0 %v71
    %1207 = vmatprep.subr.mxu0 0.0
    %1208 = vmatpush1.msra.mxu0 %v74
    %1209 = vmatprep.subr.mxu0 0.0
    %1210 = vmatpush1.msra.mxu0 %v77
    %1211 = vmatprep.subr.mxu0 0.0
    %1212 = vmatpush1.msra.mxu0 %v80
    %1213 = vmatprep.subr.mxu0 0.0
    %1214 = vmatpush1.msra.mxu0 %v83
    %1215 = vmatprep.subr.mxu0 0.0
    %1216 = vmatpush1.msra.mxu0 %v86
    %1217 = vmatprep.subr.mxu0 0.0
    %1218 = vmatpush1.msra.mxu0 %v89
    %1219 = vmatprep.subr.mxu0 0.0
    %1220 = vmatpush1.msra.mxu0 %v92
    %1221 = vmatprep.subr.mxu0 0.0
    %1222 = vmatpush1.msra.mxu0 %v95
    %1223 = vmatprep.subr.mxu0 0.0
    %1224 = vmatpush1.msra.mxu0 0.0
    %1225 = vmatprep.subr.mxu0 0.0
    %1226 = vmatpush1.msra.mxu0 0.0
    %1227 = vmatprep.subr.mxu0 0.0
    %1228 = vmatpush1.msra.mxu0 0.0
    %1229 = vmatprep.subr.mxu0 0.0
    %1230 = vmatpush1.msra.mxu0 0.0
    %1231 = vmatprep.subr.mxu0 0.0
    %1232 = vmatpush1.msra.mxu0 0.0
    %1233 = vmatprep.subr.mxu0 0.0
    %1234 = vmatpush1.msra.mxu0 0.0
    %1235 = vmatprep.subr.mxu0 0.0
    %1236 = vmatpush1.msra.mxu0 0.0
    %1237 = vmatprep.subr.mxu0 0.0
    %1238 = vmatpush1.msra.mxu0 0.0
    %1239 = vmatprep.subr.mxu0 0.0
    %1240 = vmatpush1.msra.mxu0 0.0
    %1241 = vmatprep.subr.mxu0 0.0
    %1242 = vmatpush1.msra.mxu0 0.0
    %1243 = vmatprep.subr.mxu0 0.0
    %1244 = vmatpush1.msra.mxu0 0.0
    %1245 = vmatprep.subr.mxu0 0.0
    %1246 = vmatpush1.msra.mxu0 0.0
    %1247 = vmatprep.subr.mxu0 0.0
    %1248 = vmatpush1.msra.mxu0 0.0
    %1249 = vmatprep.subr.mxu0 0.0
    %1250 = vmatpush1.msra.mxu0 0.0
    %1251 = vmatprep.subr.mxu0 0.0
    %1252 = vmatpush1.msra.mxu0 0.0
    %1253 = vmatprep.subr.mxu0 0.0
    %1254 = vmatpush1.msra.mxu0 0.0
    %1255 = vmatprep.mubr.f32.mxu0 0.0
    %1256 = vmatmul.mubr.f32.gmra.mrb[0].mxu0 %v1113
    %v1257 = vpop.f32.mrb[0].mxu0
    %v1258 = vadd.f32 0.0, %v1257
    %v1259 = vpop.f32.mrb[0].mxu0
    %1260 = vdwg.mxu0
    %v1261 = vadd.f32 %v1117, %v1187
    %v1262 = vxor.u32 %v1261, 2147483648
    %v1263 = vmul.f32 %v1262, 1.442695
    %v1264 = vpow.pop %v1263
    %v1265 = vadd.f32 %v1264, 1.0
    %v1266 = vrcp.pop %v1265
    %v1267 = vmul.f32 1.0, %v1266
    %v1268 = vadd.f32 %v1118, %v1189
    %v1269 = vxor.u32 %v1268, 2147483648
    %v1270 = vmul.f32 %v1269, 1.442695
    %v1271 = vpow.pop %v1270
    %v1272 = vadd.f32 %v1271, 1.0
    %v1273 = vrcp.pop %v1272
    %v1274 = vmul.f32 1.0, %v1273
    %v1275 = vadd.f32 %v1258, %v101
    %v1276 = vmul.f32 %v1267, %v1275
    %v1277 = vadd.f32 %v1119, %v1276
    %v1278 = vtanh.pop %v1277
    %v1279 = vsub.f32 1.0, %v1274
    %v1280 = vmul.f32 %v1279, %v1278
    %v1281 = vmul.f32 %v1274, %v1113
    %v1282 = vadd.f32 %v1280, %v1281
    %s1283 = scalar_lea.vmem [#allocation8], 48
    %1284 = vst [vmem:[%s1283] sm:$0xff] %v1282
    %s1285 = scalar_lea.vmem [#allocation3], 168
    %v1286 = vld [vmem:[%s1285] sm:$0xff]
    %v1287 = vld [vmem:[%s1285 + $0x8] sm:$0xff]
    %v1288 = vld [vmem:[%s1285 + $0x10] sm:$0xff]
    %1289 = vmatprep.subr.mxu0 %v49
    %1290 = vmatpush1.msra.mxu0 %v48
    %1291 = vmatprep.subr.mxu0 %v52
    %1292 = vmatpush1.msra.mxu0 %v51
    %1293 = vmatprep.subr.mxu0 %v55
    %1294 = vmatpush1.msra.mxu0 %v54
    %1295 = vmatprep.subr.mxu0 %v58
    %1296 = vmatpush1.msra.mxu0 %v57
    %1297 = vmatprep.subr.mxu0 %v61
    %1298 = vmatpush1.msra.mxu0 %v60
    %1299 = vmatprep.subr.mxu0 %v64
    %1300 = vmatpush1.msra.mxu0 %v63
    %1301 = vmatprep.subr.mxu0 %v67
    %1302 = vmatpush1.msra.mxu0 %v66
    %1303 = vmatprep.subr.mxu0 %v70
    %1304 = vmatpush1.msra.mxu0 %v69
    %1305 = vmatprep.subr.mxu0 %v73
    %1306 = vmatpush1.msra.mxu0 %v72
    %1307 = vmatprep.subr.mxu0 %v76
    %1308 = vmatpush1.msra.mxu0 %v75
    %1309 = vmatprep.subr.mxu0 %v79
    %1310 = vmatpush1.msra.mxu0 %v78
    %1311 = vmatprep.subr.mxu0 %v82
    %1312 = vmatpush1.msra.mxu0 %v81
    %1313 = vmatprep.subr.mxu0 %v85
    %1314 = vmatpush1.msra.mxu0 %v84
    %1315 = vmatprep.subr.mxu0 %v88
    %1316 = vmatpush1.msra.mxu0 %v87
    %1317 = vmatprep.subr.mxu0 %v91
    %1318 = vmatpush1.msra.mxu0 %v90
    %1319 = vmatprep.subr.mxu0 %v94
    %1320 = vmatpush1.msra.mxu0 %v93
    %1321 = vmatprep.subr.mxu0 0.0
    %1322 = vmatpush1.msra.mxu0 0.0
    %1323 = vmatprep.subr.mxu0 0.0
    %1324 = vmatpush1.msra.mxu0 0.0
    %1325 = vmatprep.subr.mxu0 0.0
    %1326 = vmatpush1.msra.mxu0 0.0
    %1327 = vmatprep.subr.mxu0 0.0
    %1328 = vmatpush1.msra.mxu0 0.0
    %1329 = vmatprep.subr.mxu0 0.0
    %1330 = vmatpush1.msra.mxu0 0.0
    %1331 = vmatprep.subr.mxu0 0.0
    %1332 = vmatpush1.msra.mxu0 0.0
    %1333 = vmatprep.subr.mxu0 0.0
    %1334 = vmatpush1.msra.mxu0 0.0
    %1335 = vmatprep.subr.mxu0 0.0
    %1336 = vmatpush1.msra.mxu0 0.0
    %1337 = vmatprep.subr.mxu0 0.0
    %1338 = vmatpush1.msra.mxu0 0.0
    %1339 = vmatprep.subr.mxu0 0.0
    %1340 = vmatpush1.msra.mxu0 0.0
    %1341 = vmatprep.subr.mxu0 0.0
    %1342 = vmatpush1.msra.mxu0 0.0
    %1343 = vmatprep.subr.mxu0 0.0
    %1344 = vmatpush1.msra.mxu0 0.0
    %1345 = vmatprep.subr.mxu0 0.0
    %1346 = vmatpush1.msra.mxu0 0.0
    %1347 = vmatprep.subr.mxu0 0.0
    %1348 = vmatpush1.msra.mxu0 0.0
    %1349 = vmatprep.subr.mxu0 0.0
    %1350 = vmatpush1.msra.mxu0 0.0
    %1351 = vmatprep.subr.mxu0 0.0
    %1352 = vmatpush1.msra.mxu0 0.0
    %1353 = vmatprep.mubr.f32.mxu0 0.0
    %1354 = vmatmul.mubr.f32.gmra.mrb[0].mxu0 %v1282
    %v1355 = vpop.f32.mrb[0].mxu0
    %v1356 = vadd.f32 0.0, %v1355
    %v1357 = vpop.f32.mrb[0].mxu0
    %v1358 = vadd.f32 0.0, %v1357
    %1359 = vdwg.mxu0
    %1360 = vmatprep.subr.mxu0 0.0
    %1361 = vmatpush1.msra.mxu0 %v50
    %1362 = vmatprep.subr.mxu0 0.0
    %1363 = vmatpush1.msra.mxu0 %v53
    %1364 = vmatprep.subr.mxu0 0.0
    %1365 = vmatpush1.msra.mxu0 %v56
    %1366 = vmatprep.subr.mxu0 0.0
    %1367 = vmatpush1.msra.mxu0 %v59
    %1368 = vmatprep.subr.mxu0 0.0
    %1369 = vmatpush1.msra.mxu0 %v62
    %1370 = vmatprep.subr.mxu0 0.0
    %1371 = vmatpush1.msra.mxu0 %v65
    %1372 = vmatprep.subr.mxu0 0.0
    %1373 = vmatpush1.msra.mxu0 %v68
    %1374 = vmatprep.subr.mxu0 0.0
    %1375 = vmatpush1.msra.mxu0 %v71
    %1376 = vmatprep.subr.mxu0 0.0
    %1377 = vmatpush1.msra.mxu0 %v74
    %1378 = vmatprep.subr.mxu0 0.0
    %1379 = vmatpush1.msra.mxu0 %v77
    %1380 = vmatprep.subr.mxu0 0.0
    %1381 = vmatpush1.msra.mxu0 %v80
    %1382 = vmatprep.subr.mxu0 0.0
    %1383 = vmatpush1.msra.mxu0 %v83
    %1384 = vmatprep.subr.mxu0 0.0
    %1385 = vmatpush1.msra.mxu0 %v86
    %1386 = vmatprep.subr.mxu0 0.0
    %1387 = vmatpush1.msra.mxu0 %v89
    %1388 = vmatprep.subr.mxu0 0.0
    %1389 = vmatpush1.msra.mxu0 %v92
    %1390 = vmatprep.subr.mxu0 0.0
    %1391 = vmatpush1.msra.mxu0 %v95
    %1392 = vmatprep.subr.mxu0 0.0
    %1393 = vmatpush1.msra.mxu0 0.0
    %1394 = vmatprep.subr.mxu0 0.0
    %1395 = vmatpush1.msra.mxu0 0.0
    %1396 = vmatprep.subr.mxu0 0.0
    %1397 = vmatpush1.msra.mxu0 0.0
    %1398 = vmatprep.subr.mxu0 0.0
    %1399 = vmatpush1.msra.mxu0 0.0
    %1400 = vmatprep.subr.mxu0 0.0
    %1401 = vmatpush1.msra.mxu0 0.0
    %1402 = vmatprep.subr.mxu0 0.0
    %1403 = vmatpush1.msra.mxu0 0.0
    %1404 = vmatprep.subr.mxu0 0.0
    %1405 = vmatpush1.msra.mxu0 0.0
    %1406 = vmatprep.subr.mxu0 0.0
    %1407 = vmatpush1.msra.mxu0 0.0
    %1408 = vmatprep.subr.mxu0 0.0
    %1409 = vmatpush1.msra.mxu0 0.0
    %1410 = vmatprep.subr.mxu0 0.0
    %1411 = vmatpush1.msra.mxu0 0.0
    %1412 = vmatprep.subr.mxu0 0.0
    %1413 = vmatpush1.msra.mxu0 0.0
    %1414 = vmatprep.subr.mxu0 0.0
    %1415 = vmatpush1.msra.mxu0 0.0
    %1416 = vmatprep.subr.mxu0 0.0
    %1417 = vmatpush1.msra.mxu0 0.0
    %1418 = vmatprep.subr.mxu0 0.0
    %1419 = vmatpush1.msra.mxu0 0.0
    %1420 = vmatprep.subr.mxu0 0.0
    %1421 = vmatpush1.msra.mxu0 0.0
    %1422 = vmatprep.subr.mxu0 0.0
    %1423 = vmatpush1.msra.mxu0 0.0
    %1424 = vmatprep.mubr.f32.mxu0 0.0
    %1425 = vmatmul.mubr.f32.gmra.mrb[0].mxu0 %v1282
    %v1426 = vpop.f32.mrb[0].mxu0
    %v1427 = vadd.f32 0.0, %v1426
    %v1428 = vpop.f32.mrb[0].mxu0
    %1429 = vdwg.mxu0
    %v1430 = vadd.f32 %v1286, %v1356
    %v1431 = vxor.u32 %v1430, 2147483648
    %v1432 = vmul.f32 %v1431, 1.442695
    %v1433 = vpow.pop %v1432
    %v1434 = vadd.f32 %v1433, 1.0
    %v1435 = vrcp.pop %v1434
    %v1436 = vmul.f32 1.0, %v1435
    %v1437 = vadd.f32 %v1287, %v1358
    %v1438 = vxor.u32 %v1437, 2147483648
    %v1439 = vmul.f32 %v1438, 1.442695
    %v1440 = vpow.pop %v1439
    %v1441 = vadd.f32 %v1440, 1.0
    %v1442 = vrcp.pop %v1441
    %v1443 = vmul.f32 1.0, %v1442
    %v1444 = vadd.f32 %v1427, %v101
    %v1445 = vmul.f32 %v1436, %v1444
    %v1446 = vadd.f32 %v1288, %v1445
    %v1447 = vtanh.pop %v1446
    %v1448 = vsub.f32 1.0, %v1443
    %v1449 = vmul.f32 %v1448, %v1447
    %v1450 = vmul.f32 %v1443, %v1282
    %v1451 = vadd.f32 %v1449, %v1450
    %s1452 = scalar_lea.vmem [#allocation8], 56
    %1453 = vst [vmem:[%s1452] sm:$0xff] %v1451
    %1454 = vst [vmem:[#allocation2] sm:$0xff] %v1451
    // Predicated region
    $region26: #{tpu_custom_call.1} parent=1 // pred_check
      _
    $region27: #{tpu_custom_call.1} parent=1 // pred_check_branch
      %1456 = sbr.rel (0) target = $region29
    $region28: #{tpu_custom_call.1} parent=1 // pred_region
      %s1458 = ssub.s32 1024, 1024
      %1459 = vsyncadd [#allocation5], %s1458
      %s1460 = sshll.u32 [#allocation8], 4
      %s1461 = int_to_ptr.vmem [resolvable:$true] %s1460
      %1466 = dma.vmem_to_hbm [thread:$0]  %s1461, 1024, %s3, [#allocation5], 128, 128, 8
    $region29: #{tpu_custom_call.1} parent=1 // pred_fallthru
      _
    // Predicated region
    $region30: #{tpu_custom_call.1} parent=1 // pred_check
      _
    $region31: #{tpu_custom_call.1} parent=1 // pred_check_branch
      %1468 = sbr.rel (0) target = $region33
    $region32: #{tpu_custom_call.1} parent=1 // pred_region
      %1469 = dma.done [#allocation5], 1024
    $region33: #{tpu_custom_call.1} parent=1 // pred_fallthru
      _
    %1470 = vsyncpa [#allocation4], 1
    %1471 = vsyncpa [#allocation7], 1
    %1472 = vsyncpa [#allocation5], 1

</llo_original>
